<compile_context>
chip_gen: v5e
topology: v5e:2x2
jax: 0.10.0
libtpu: 0.0.40
codegen_flags: <defaults>
</compile_context>

<pallas_src>
import jax
import jax.numpy as jnp
import numpy as np
from jax import lax
from jax.experimental import pallas as pl
from jax.experimental.pallas import tpu as pltpu

EPS = 1e-5   # MambaRMSNorm epsilon (config.layer_norm_epsilon)
SUB = 8      # timesteps unrolled per inner scan step (8-row aligned y stores)
PAD = 8      # sublane-aligned start row of the current chunk in the conv buffer


def _softplus(x):
    # matches torch.nn.functional.softplus (threshold = 20); exp/log only.
    return jnp.where(x > 20.0, x, jnp.log(1.0 + jnp.exp(jnp.minimum(x, 20.0))))


def _silu(x):
    return x * (1.0 / (1.0 + jnp.exp(-x)))


def _mamba_block_kernel(x_ref, norm_w_ref, w_in_s_ref, w_in_g_ref,
                        conv_w_ref, conv_b_ref, w_xp_ref, w_dtp_ref,
                        b_dtp_ref, a_neg_ref, d_ref, w_out_ref,
                        o_ref,
                        state_ref, conv_buf_ref, y_ref,
                        dt_ref, dtu_ref, bmat_ref, cmat_ref):
    TL = x_ref.shape[1]            # seq tile (timesteps per grid step)
    K = conv_w_ref.shape[0]        # conv kernel size
    N = a_neg_ref.shape[0]         # ssm state size
    R = w_dtp_ref.shape[0]         # time_step_rank

    # ---- zero the carried state / conv history at the start of each sequence ----
    @pl.when(pl.program_id(1) == 0)
    def _init():
        state_ref[...] = jnp.zeros_like(state_ref)
        conv_buf_ref[...] = jnp.zeros_like(conv_buf_ref)

    x_blk = x_ref[0]                                                 # (TL, H) fp32

    # ---- RMSNorm (fp32) ----
    var = jnp.mean(x_blk * x_blk, axis=-1, keepdims=True)
    xn = x_blk * lax.rsqrt(var + EPS) * norm_w_ref[...]              # (TL, H)
    xn_b = xn.astype(w_in_s_ref.dtype)                               # bf16 MXU operand

    # ---- in_proj: states / gates (bf16 x bf16 -> fp32 accumulate) ----
    hs0 = jnp.dot(xn_b, w_in_s_ref[...], preferred_element_type=jnp.float32)   # (TL, D)
    gate = jnp.dot(xn_b, w_in_g_ref[...], preferred_element_type=jnp.float32)  # (TL, D)

    # ---- causal depthwise conv1d + SiLU ----
    # conv_buf rows [PAD-(K-1), PAD) hold the last K-1 raw rows of the previous
    # chunk (zeros for the first chunk); the current chunk is written at the
    # sublane-aligned row PAD (aligned (TL, D) store).
    conv_buf_ref[PAD:, :] = hs0
    acc = conv_b_ref[...]                                            # (1, D) broadcast
    base = PAD - (K - 1)
    for k in range(K):                                               # static-offset taps
        acc = acc + conv_buf_ref[base + k:base + k + TL, :] * conv_w_ref[k:k + 1, :]
    # carry the last K-1 raw rows forward as history for the next chunk
    conv_buf_ref[PAD - (K - 1):PAD, :] = conv_buf_ref[PAD + TL - (K - 1):, :]
    hs = _silu(acc)                                                  # (TL, D) fp32

    # ---- fused x_proj: one (TL, D) @ (D, R+2N) matmul, static lane slices ----
    hs_b = hs.astype(w_xp_ref.dtype)
    xp = jnp.dot(hs_b, w_xp_ref[...], preferred_element_type=jnp.float32)  # (TL, R+2N)
    dt_in = xp[:, :R]                                                # (TL, R)
    b_blk = xp[:, R:R + N]                                           # (TL, N)
    c_blk = xp[:, R + N:R + 2 * N]                                   # (TL, N)

    # ---- dt_proj (bf16 matmul, fp32 accumulate) + bias + softplus (fp32) ----
    dt = _softplus(jnp.dot(dt_in.astype(w_dtp_ref.dtype), w_dtp_ref[...],
                           preferred_element_type=jnp.float32) + b_dtp_ref[...])  # (TL, D)

    # ---- stage scan inputs in VMEM (aligned SUB-row reads inside the loop) ----
    dt_ref[...] = dt
    dtu_ref[...] = dt * hs
    bmat_ref[...] = b_blk
    cmat_ref[...] = c_blk

    a_neg = a_neg_ref[...]                 # (N, D) = -exp(A_log).T (host-precomputed)
    n_sub = TL // SUB

    # ---- selective scan: fori_loop over SUB-step sub-chunks, state carried ----
    def sub_body(i, state):
        off = pl.multiple_of(i * SUB, SUB)
        dt_s = dt_ref[pl.ds(off, SUB), :]                 # (SUB, D)
        dtu_s = dtu_ref[pl.ds(off, SUB), :]               # (SUB, D)
        bT = bmat_ref[pl.ds(off, SUB), :].T               # (N, SUB) tiny transpose
        cT = cmat_ref[pl.ds(off, SUB), :].T               # (N, SUB)
        # hoisted off the serial chain: all exps (EUP) and B outer-products
        # (VPU) for the sub-chunk are state-independent and issue up front.
        dA = [jnp.exp(a_neg * dt_s[t:t + 1, :]) for t in range(SUB)]        # (N, D)
        dBu = [bT[:, t:t + 1] * dtu_s[t:t + 1, :] for t in range(SUB)]      # (N, D)
        ys = []
        for t in range(SUB):
            state = dA[t] * state + dBu[t]                # chain = one VPU fma / step
            # readout on VPU + sublane-sum (no per-step MXU push/pop):
            ys.append(jnp.sum(cT[:, t:t + 1] * state, axis=0, keepdims=True))  # (1, D)
        y_ref[pl.ds(off, SUB), :] = jnp.concatenate(ys, axis=0)  # aligned 8-row store
        return state

    state = lax.fori_loop(0, n_sub, sub_body, state_ref[...],
                          unroll=(n_sub <= 4))
    state_ref[...] = state

    # ---- D skip, SiLU gate, out_proj ----
    scan_out = (y_ref[...] + hs * d_ref[...]) * _silu(gate)          # (TL, D) fp32
    out = jnp.dot(scan_out.astype(w_out_ref.dtype), w_out_ref[...],
                  preferred_element_type=jnp.float32)                # (TL, H)

    # ---- residual add in fp32 (x re-read right before use) ----
    o_ref[0] = x_ref[0] + out


def mamba_block_forward(x, p, *, seq_tile=128):
    # seq_tile: 128 is a good default (use 256 on v6e/v7x); the demo uses 16.
    B, L, H = x.shape
    D = p["w_in_states_t"].shape[1]
    N = p["a_neg"].shape[0]
    K = p["conv_w_t"].shape[0]
    TL = min(seq_tile, L)
    assert L % TL == 0, "seq_len must be a multiple of the seq tile"
    assert TL % SUB == 0 and TL >= SUB
    assert K - 1 <= PAD

    bf16 = jnp.bfloat16
    # bf16 copies of the matmul weights (fp32 masters stay in `p`); elementwise
    # parameters, conv, bias, A and D stay fp32.
    weights = [
        p["norm_w"],                        # (1, H)       fp32
        p["w_in_states_t"].astype(bf16),    # (H, D)
        p["w_in_gates_t"].astype(bf16),     # (H, D)
        p["conv_w_t"],                      # (K, D)       fp32
        p["conv_b"],                        # (1, D)       fp32
        p["w_xproj_t"].astype(bf16),        # (D, R+2N)    fused dt|B|C
        p["w_dtproj_t"].astype(bf16),       # (R, D)
        p["dtproj_b"],                      # (1, D)       fp32
        p["a_neg"],                         # (N, D)       fp32, -exp(A_log).T
        p["d"],                             # (1, D)       fp32
        p["w_out_t"].astype(bf16),          # (D, H)
    ]

    def full(arr):
        # grid-constant full-block weight (Pallas DMAs it once).
        # TODO(synk): at real model sizes K-tile in_proj/out_proj contractions
        # (extra grid axis + fp32 VMEM accumulator) and use pl.Buffered(1);
        # mandatory on v7x (64 MiB VMEM).
        assert arr.ndim == 2
        return pl.BlockSpec(arr.shape, lambda b, s: (0, 0))

    in_specs = [pl.BlockSpec((1, TL, H), lambda b, s: (b, s, 0))] + \
               [full(w) for w in weights]

    grid_spec = pltpu.PrefetchScalarGridSpec(
        num_scalar_prefetch=0,
        grid=(B, L // TL),                                 # seq axis innermost
        in_specs=in_specs,
        out_specs=pl.BlockSpec((1, TL, H), lambda b, s: (b, s, 0)),
        scratch_shapes=[
            pltpu.VMEM((N, D), jnp.float32),               # carried SSM state
            pltpu.VMEM((TL + PAD, D), jnp.float32),        # conv buffer (aligned chunk)
            pltpu.VMEM((TL, D), jnp.float32),              # y
            pltpu.VMEM((TL, D), jnp.float32),              # dt
            pltpu.VMEM((TL, D), jnp.float32),              # dt * u
            pltpu.VMEM((TL, N), jnp.float32),              # B
            pltpu.VMEM((TL, N), jnp.float32),              # C
        ],
    )
    return pl.pallas_call(
        _mamba_block_kernel,
        out_shape=jax.ShapeDtypeStruct((B, L, H), jnp.float32),
        grid_spec=grid_spec,
        compiler_params=pltpu.CompilerParams(
            dimension_semantics=("parallel", "arbitrary"),
            vmem_limit_bytes=48 * 1024 * 1024),
    )(x, *weights)


def init_params(key, H, D, N, K, R):
    ks = jax.random.split(key, 8)
    s = 0.15

    def rn(k, shape):
        return s * jax.random.normal(k, shape, jnp.float32)

    w_in = rn(ks[0], (2 * D, H))            # in_proj weight, split like the module
    w_in_states = w_in[:D]
    w_in_gates = w_in[-D:]
    conv_w = rn(ks[1], (D, 1, K))           # depthwise conv1d weight
    conv_b = rn(ks[2], (D,))
    x_proj = rn(ks[3], (R + 2 * N, D))      # rows: [dt | B | C]
    w_dtproj = rn(ks[4], (D, R))
    b_dtproj = rn(ks[5], (D,)) + 0.1
    a_log = jnp.log(jnp.tile(jnp.arange(1, N + 1, dtype=jnp.float32)[None, :], (D, 1)))
    d_param = jnp.ones((D,), jnp.float32)
    norm_w = jnp.ones((H,), jnp.float32) + rn(ks[6], (H,))
    w_out = rn(ks[7], (H, D))
    return {
        "norm_w": norm_w[None, :],
        "w_in_states_t": w_in_states.T,     # (H, D)
        "w_in_gates_t": w_in_gates.T,       # (H, D)
        "conv_w_t": conv_w[:, 0, :].T,      # (K, D)
        "conv_b": conv_b[None, :],          # (1, D)
        "w_xproj_t": x_proj.T,              # (D, R+2N) fused x_proj (dt|B|C columns)
        "w_dtproj_t": w_dtproj.T,           # (R, D)
        "dtproj_b": b_dtproj[None, :],      # (1, D)
        "a_neg": (-jnp.exp(a_log)).T,       # (N, D) = -exp(A_log), host-precomputed
        "d": d_param[None, :],              # (1, D)
        "w_out_t": w_out.T,                 # (D, H)
    }


def ref_forward(x, p):
    # pure-JAX fp32 reference mirroring MambaBlock.forward (cache_params=None).
    norm_w = p["norm_w"][0]
    var = jnp.mean(x * x, axis=-1, keepdims=True)
    xn = x * lax.rsqrt(var + EPS) * norm_w
    hs = xn @ p["w_in_states_t"]
    gate = xn @ p["w_in_gates_t"]
    K = p["conv_w_t"].shape[0]
    B_, L, D = hs.shape
    hs_pad = jnp.pad(hs, ((0, 0), (K - 1, 0), (0, 0)))
    conv = p["conv_b"][0][None, None, :]
    for k in range(K):
        conv = conv + hs_pad[:, k:k + L, :] * p["conv_w_t"][k][None, None, :]
    hs = _silu(conv)
    xp = hs @ p["w_xproj_t"]
    R = p["w_dtproj_t"].shape[0]
    N = p["a_neg"].shape[0]
    dt_in = xp[..., :R]
    bmat = xp[..., R:R + N]
    cmat = xp[..., R + N:R + 2 * N]
    dt = _softplus(dt_in @ p["w_dtproj_t"] + p["dtproj_b"][0])
    A = p["a_neg"].T                        # (D, N) == -exp(A_log)
    ssm = jnp.zeros((B_, D, N), jnp.float32)
    ys = []
    for i in range(L):
        dA = jnp.exp(A[None] * dt[:, i, :, None])
        dBu = dt[:, i, :, None] * bmat[:, i, None, :] * hs[:, i, :, None]
        ssm = dA * ssm + dBu
        ys.append(jnp.sum(ssm * cmat[:, i, None, :], axis=-1))
    y = jnp.stack(ys, axis=1)
    scan_out = (y + hs * p["d"][0]) * _silu(gate)
    out = scan_out @ p["w_out_t"]
    return x + out


if __name__ == "__main__":
    # Small config consistent with the module: hidden=32, intermediate=64,
    # ssm_state=16, conv_kernel=4, time_step_rank=2; batch=2, seq=32.
    # seq_tile=16 so both the cross-chunk state/conv carry (L//TL = 2) and the
    # multi-sub-chunk inner scan loop (TL//SUB = 2) are exercised.
    # (For perf measurement use lane-dense H, D multiples of 128/256 and
    #  seq_tile 128/256 — this toy config is for correctness only.)
    H, D, N, K, R = 32, 64, 16, 4, 2
    B, L, TL = 2, 32, 16

    key = jax.random.PRNGKey(0)
    kx, kp = jax.random.split(key)
    x = jax.random.normal(kx, (B, L, H), jnp.float32)
    params = init_params(kp, H, D, N, K, R)

    out = mamba_block_forward(x, params, seq_tile=TL)
    out = jax.block_until_ready(out)

    ref = ref_forward(x, params)
    # tolerance covers bf16 matmul operands in the kernel vs. the fp32 reference
    np.testing.assert_allclose(np.asarray(out), np.asarray(ref), rtol=2e-2, atol=2e-2)
    print("KERNEL_OK")
</pallas_src>

<mosaic_0001>
module attributes {stable_mosaic.version = 11 : i64} {
  func.func @_mamba_block_kernel(%arg0: i32, %arg1: i32, %arg2: memref<1x16x32xf32, #tpu.memory_space<vmem>>, %arg3: memref<1x32xf32, #tpu.memory_space<vmem>>, %arg4: memref<32x64xbf16, #tpu.memory_space<vmem>>, %arg5: memref<32x64xbf16, #tpu.memory_space<vmem>>, %arg6: memref<4x64xf32, #tpu.memory_space<vmem>>, %arg7: memref<1x64xf32, #tpu.memory_space<vmem>>, %arg8: memref<64x34xbf16, #tpu.memory_space<vmem>>, %arg9: memref<2x64xbf16, #tpu.memory_space<vmem>>, %arg10: memref<1x64xf32, #tpu.memory_space<vmem>>, %arg11: memref<16x64xf32, #tpu.memory_space<vmem>>, %arg12: memref<1x64xf32, #tpu.memory_space<vmem>>, %arg13: memref<64x32xbf16, #tpu.memory_space<vmem>>, %arg14: memref<1x16x32xf32, #tpu.memory_space<vmem>>, %arg15: memref<16x64xf32, #tpu.memory_space<vmem>>, %arg16: memref<24x64xf32, #tpu.memory_space<vmem>>, %arg17: memref<16x64xf32, #tpu.memory_space<vmem>>, %arg18: memref<16x64xf32, #tpu.memory_space<vmem>>, %arg19: memref<16x64xf32, #tpu.memory_space<vmem>>, %arg20: memref<16x16xf32, #tpu.memory_space<vmem>>, %arg21: memref<16x16xf32, #tpu.memory_space<vmem>>) attributes {dimension_semantics = [#tpu.dimension_semantics<parallel>, #tpu.dimension_semantics<arbitrary>], iteration_bounds = array<i64: 2, 2>, scalar_prefetch = 0 : i64, scratch_operands = 7 : i64, tpu.core_type = #tpu.core_type<tc>, window_params = [{transform_indices = @transform_0, window_bounds = array<i64: 1, 16, 32>}, {pipeline_mode = #tpu.pipeline_mode<synchronous>, transform_indices = @transform_1, window_bounds = array<i64: 1, 32>}, {pipeline_mode = #tpu.pipeline_mode<synchronous>, transform_indices = @transform_2, window_bounds = array<i64: 32, 64>}, {pipeline_mode = #tpu.pipeline_mode<synchronous>, transform_indices = @transform_3, window_bounds = array<i64: 32, 64>}, {pipeline_mode = #tpu.pipeline_mode<synchronous>, transform_indices = @transform_4, window_bounds = array<i64: 4, 64>}, {pipeline_mode = #tpu.pipeline_mode<synchronous>, transform_indices = @transform_5, window_bounds = array<i64: 1, 64>}, {pipeline_mode = #tpu.pipeline_mode<synchronous>, transform_indices = @transform_6, window_bounds = array<i64: 64, 34>}, {pipeline_mode = #tpu.pipeline_mode<synchronous>, transform_indices = @transform_7, window_bounds = array<i64: 2, 64>}, {pipeline_mode = #tpu.pipeline_mode<synchronous>, transform_indices = @transform_8, window_bounds = array<i64: 1, 64>}, {pipeline_mode = #tpu.pipeline_mode<synchronous>, transform_indices = @transform_9, window_bounds = array<i64: 16, 64>}, {pipeline_mode = #tpu.pipeline_mode<synchronous>, transform_indices = @transform_10, window_bounds = array<i64: 1, 64>}, {pipeline_mode = #tpu.pipeline_mode<synchronous>, transform_indices = @transform_11, window_bounds = array<i64: 64, 32>}, {transform_indices = @transform_12, window_bounds = array<i64: 1, 16, 32>}]} {
    %c0_i32 = arith.constant 0 : i32
    %0 = arith.cmpi eq, %arg1, %c0_i32 : i32
    %1 = arith.extui %0 : i1 to i32
    %c0_i32_0 = arith.constant 0 : i32
    %2 = arith.cmpi ne, %1, %c0_i32_0 : i32
    scf.if %2 {
      %cst_101 = arith.constant 0.000000e+00 : f32
      %394 = vector.broadcast %cst_101 : f32 to vector<16x64xf32>
      %c0_102 = arith.constant 0 : index
      %c0_103 = arith.constant 0 : index
      %395 = vector.load %arg15[%c0_102, %c0_103] : memref<16x64xf32, #tpu.memory_space<vmem>>, vector<16x64xf32>
      tpu.vector_store %arg15[%c0_102, %c0_103], %394 {strides = array<i32>} : memref<16x64xf32, #tpu.memory_space<vmem>>, vector<16x64xf32>,
      %cst_104 = arith.constant 0.000000e+00 : f32
      %396 = vector.broadcast %cst_104 : f32 to vector<24x64xf32>
      %c0_105 = arith.constant 0 : index
      %c0_106 = arith.constant 0 : index
      %397 = vector.load %arg16[%c0_105, %c0_106] : memref<24x64xf32, #tpu.memory_space<vmem>>, vector<24x64xf32>
      tpu.vector_store %arg16[%c0_105, %c0_106], %396 {strides = array<i32>} : memref<24x64xf32, #tpu.memory_space<vmem>>, vector<24x64xf32>,
    } else {
    }
    %c0 = arith.constant 0 : index
    %c0_1 = arith.constant 0 : index
    %c0_2 = arith.constant 0 : index
    %3 = vector.load %arg2[%c0, %c0_1, %c0_2] : memref<1x16x32xf32, #tpu.memory_space<vmem>>, vector<1x16x32xf32>
    %4 = vector.shape_cast %3 : vector<1x16x32xf32> to vector<16x32xf32>
    %5 = arith.mulf %4, %4 : vector<16x32xf32>
    %cst = arith.constant dense<0.000000e+00> : vector<16xf32>
    %6 = vector.multi_reduction <add>, %5, %cst [1] : vector<16x32xf32> to vector<16xf32>
    %7 = vector.shape_cast %6 : vector<16xf32> to vector<16x1xf32>
    %cst_3 = arith.constant 3.200000e+01 : f32
    %8 = vector.broadcast %cst_3 : f32 to vector<16x1xf32>
    %9 = arith.divf %7, %8 : vector<16x1xf32>
    %cst_4 = arith.constant 9.99999974E-6 : f32
    %10 = vector.broadcast %cst_4 : f32 to vector<16x1xf32>
    %11 = arith.addf %9, %10 : vector<16x1xf32>
    %12 = math.rsqrt %11 : vector<16x1xf32>
    %13 = vector.broadcast %12 : vector<16x1xf32> to vector<16x32xf32>
    %14 = arith.mulf %4, %13 : vector<16x32xf32>
    %c0_5 = arith.constant 0 : index
    %c0_6 = arith.constant 0 : index
    %15 = vector.load %arg3[%c0_5, %c0_6] : memref<1x32xf32, #tpu.memory_space<vmem>>, vector<1x32xf32>
    %16 = vector.broadcast %15 : vector<1x32xf32> to vector<16x32xf32>
    %17 = arith.mulf %14, %16 : vector<16x32xf32>
    %18 = arith.truncf %17 : vector<16x32xf32> to vector<16x32xbf16>
    %c0_7 = arith.constant 0 : index
    %c0_8 = arith.constant 0 : index
    %19 = vector.load %arg4[%c0_7, %c0_8] : memref<32x64xbf16, #tpu.memory_space<vmem>>, vector<32x64xbf16>
    %cst_9 = arith.constant dense<0.000000e+00> : vector<16x64xf32>
    %20 = tpu.matmul %18, %19, %cst_9 {dimension_numbers = #tpu.dot_dimension_numbers<[1], [0], [0], [1], [0, 0, 1, 1], [], []>} : vector<16x32xbf16>, vector<32x64xbf16>, vector<16x64xf32> -> vector<16x64xf32>
    %c0_10 = arith.constant 0 : index
    %c0_11 = arith.constant 0 : index
    %21 = vector.load %arg5[%c0_10, %c0_11] : memref<32x64xbf16, #tpu.memory_space<vmem>>, vector<32x64xbf16>
    %cst_12 = arith.constant dense<0.000000e+00> : vector<16x64xf32>
    %22 = tpu.matmul %18, %21, %cst_12 {dimension_numbers = #tpu.dot_dimension_numbers<[1], [0], [0], [1], [0, 0, 1, 1], [], []>} : vector<16x32xbf16>, vector<32x64xbf16>, vector<16x64xf32> -> vector<16x64xf32>
    %c8 = arith.constant 8 : index
    %c0_13 = arith.constant 0 : index
    %23 = vector.load %arg16[%c8, %c0_13] : memref<24x64xf32, #tpu.memory_space<vmem>>, vector<16x64xf32>
    tpu.vector_store %arg16[%c8, %c0_13], %20 {strides = array<i32>} : memref<24x64xf32, #tpu.memory_space<vmem>>, vector<16x64xf32>,
    %c0_14 = arith.constant 0 : index
    %c0_15 = arith.constant 0 : index
    %24 = vector.load %arg7[%c0_14, %c0_15] : memref<1x64xf32, #tpu.memory_space<vmem>>, vector<1x64xf32>
    %c5 = arith.constant 5 : index
    %c0_16 = arith.constant 0 : index
    %25 = vector.load %arg16[%c5, %c0_16] : memref<24x64xf32, #tpu.memory_space<vmem>>, vector<16x64xf32>
    %c0_17 = arith.constant 0 : index
    %c0_18 = arith.constant 0 : index
    %26 = vector.load %arg6[%c0_17, %c0_18] : memref<4x64xf32, #tpu.memory_space<vmem>>, vector<1x64xf32>
    %27 = vector.broadcast %26 : vector<1x64xf32> to vector<16x64xf32>
    %28 = arith.mulf %25, %27 : vector<16x64xf32>
    %29 = vector.broadcast %24 : vector<1x64xf32> to vector<16x64xf32>
    %30 = arith.addf %29, %28 : vector<16x64xf32>
    %c6 = arith.constant 6 : index
    %c0_19 = arith.constant 0 : index
    %31 = vector.load %arg16[%c6, %c0_19] : memref<24x64xf32, #tpu.memory_space<vmem>>, vector<16x64xf32>
    %c1 = arith.constant 1 : index
    %c0_20 = arith.constant 0 : index
    %32 = vector.load %arg6[%c1, %c0_20] : memref<4x64xf32, #tpu.memory_space<vmem>>, vector<1x64xf32>
    %33 = vector.broadcast %32 : vector<1x64xf32> to vector<16x64xf32>
    %34 = arith.mulf %31, %33 : vector<16x64xf32>
    %35 = arith.addf %30, %34 : vector<16x64xf32>
    %c7 = arith.constant 7 : index
    %c0_21 = arith.constant 0 : index
    %36 = vector.load %arg16[%c7, %c0_21] : memref<24x64xf32, #tpu.memory_space<vmem>>, vector<16x64xf32>
    %c2 = arith.constant 2 : index
    %c0_22 = arith.constant 0 : index
    %37 = vector.load %arg6[%c2, %c0_22] : memref<4x64xf32, #tpu.memory_space<vmem>>, vector<1x64xf32>
    %38 = vector.broadcast %37 : vector<1x64xf32> to vector<16x64xf32>
    %39 = arith.mulf %36, %38 : vector<16x64xf32>
    %40 = arith.addf %35, %39 : vector<16x64xf32>
    %c8_23 = arith.constant 8 : index
    %c0_24 = arith.constant 0 : index
    %41 = vector.load %arg16[%c8_23, %c0_24] : memref<24x64xf32, #tpu.memory_space<vmem>>, vector<16x64xf32>
    %c3 = arith.constant 3 : index
    %c0_25 = arith.constant 0 : index
    %42 = vector.load %arg6[%c3, %c0_25] : memref<4x64xf32, #tpu.memory_space<vmem>>, vector<1x64xf32>
    %43 = vector.broadcast %42 : vector<1x64xf32> to vector<16x64xf32>
    %44 = arith.mulf %41, %43 : vector<16x64xf32>
    %45 = arith.addf %40, %44 : vector<16x64xf32>
    %c21 = arith.constant 21 : index
    %c0_26 = arith.constant 0 : index
    %46 = vector.load %arg16[%c21, %c0_26] : memref<24x64xf32, #tpu.memory_space<vmem>>, vector<3x64xf32>
    %c5_27 = arith.constant 5 : index
    %c0_28 = arith.constant 0 : index
    %47 = vector.load %arg16[%c5_27, %c0_28] : memref<24x64xf32, #tpu.memory_space<vmem>>, vector<3x64xf32>
    tpu.vector_store %arg16[%c5_27, %c0_28], %46 {strides = array<i32>} : memref<24x64xf32, #tpu.memory_space<vmem>>, vector<3x64xf32>,
    %cst_29 = arith.constant 0.000000e+00 : f32
    %48 = vector.broadcast %cst_29 : f32 to vector<16x64xf32>
    %49 = arith.subf %48, %45 : vector<16x64xf32>
    %50 = math.exp %49 : vector<16x64xf32>
    %cst_30 = arith.constant 1.000000e+00 : f32
    %51 = vector.broadcast %cst_30 : f32 to vector<16x64xf32>
    %52 = arith.addf %51, %50 : vector<16x64xf32>
    %cst_31 = arith.constant 1.000000e+00 : f32
    %53 = vector.broadcast %cst_31 : f32 to vector<16x64xf32>
    %54 = arith.divf %53, %52 : vector<16x64xf32>
    %55 = arith.mulf %45, %54 : vector<16x64xf32>
    %56 = arith.truncf %55 : vector<16x64xf32> to vector<16x64xbf16>
    %c0_32 = arith.constant 0 : index
    %c0_33 = arith.constant 0 : index
    %57 = vector.load %arg8[%c0_32, %c0_33] : memref<64x34xbf16, #tpu.memory_space<vmem>>, vector<64x34xbf16>
    %cst_34 = arith.constant dense<0.000000e+00> : vector<16x34xf32>
    %58 = tpu.matmul %56, %57, %cst_34 {dimension_numbers = #tpu.dot_dimension_numbers<[1], [0], [0], [1], [0, 0, 1, 1], [], []>} : vector<16x64xbf16>, vector<64x34xbf16>, vector<16x34xf32> -> vector<16x34xf32>
    %59 = vector.extract_strided_slice %58 {offsets = [0, 0], sizes = [16, 2], strides = [1, 1]} : vector<16x34xf32> to vector<16x2xf32>
    %60 = vector.extract_strided_slice %58 {offsets = [0, 2], sizes = [16, 16], strides = [1, 1]} : vector<16x34xf32> to vector<16x16xf32>
    %61 = vector.extract_strided_slice %58 {offsets = [0, 18], sizes = [16, 16], strides = [1, 1]} : vector<16x34xf32> to vector<16x16xf32>
    %62 = arith.truncf %59 : vector<16x2xf32> to vector<16x2xbf16>
    %c0_35 = arith.constant 0 : index
    %c0_36 = arith.constant 0 : index
    %63 = vector.load %arg9[%c0_35, %c0_36] : memref<2x64xbf16, #tpu.memory_space<vmem>>, vector<2x64xbf16>
    %cst_37 = arith.constant dense<0.000000e+00> : vector<16x64xf32>
    %64 = tpu.matmul %62, %63, %cst_37 {dimension_numbers = #tpu.dot_dimension_numbers<[1], [0], [0], [1], [0, 0, 1, 1], [], []>} : vector<16x2xbf16>, vector<2x64xbf16>, vector<16x64xf32> -> vector<16x64xf32>
    %c0_38 = arith.constant 0 : index
    %c0_39 = arith.constant 0 : index
    %65 = vector.load %arg10[%c0_38, %c0_39] : memref<1x64xf32, #tpu.memory_space<vmem>>, vector<1x64xf32>
    %66 = vector.broadcast %65 : vector<1x64xf32> to vector<16x64xf32>
    %67 = arith.addf %64, %66 : vector<16x64xf32>
    %cst_40 = arith.constant 2.000000e+01 : f32
    %68 = vector.broadcast %cst_40 : f32 to vector<16x64xf32>
    %69 = arith.cmpf ogt, %67, %68 : vector<16x64xf32>
    %cst_41 = arith.constant 2.000000e+01 : f32
    %70 = vector.broadcast %cst_41 : f32 to vector<16x64xf32>
    %71 = arith.minimumf %67, %70 : vector<16x64xf32>
    %72 = math.exp %71 : vector<16x64xf32>
    %cst_42 = arith.constant 1.000000e+00 : f32
    %73 = vector.broadcast %cst_42 : f32 to vector<16x64xf32>
    %74 = arith.addf %73, %72 : vector<16x64xf32>
    %75 = math.log %74 : vector<16x64xf32>
    %76 = arith.select %69, %67, %75 : vector<16x64xi1>, vector<16x64xf32>
    %c0_43 = arith.constant 0 : index
    %c0_44 = arith.constant 0 : index
    %77 = vector.load %arg18[%c0_43, %c0_44] : memref<16x64xf32, #tpu.memory_space<vmem>>, vector<16x64xf32>
    tpu.vector_store %arg18[%c0_43, %c0_44], %76 {strides = array<i32>} : memref<16x64xf32, #tpu.memory_space<vmem>>, vector<16x64xf32>,
    %78 = arith.mulf %76, %55 : vector<16x64xf32>
    %c0_45 = arith.constant 0 : index
    %c0_46 = arith.constant 0 : index
    %79 = vector.load %arg19[%c0_45, %c0_46] : memref<16x64xf32, #tpu.memory_space<vmem>>, vector<16x64xf32>
    tpu.vector_store %arg19[%c0_45, %c0_46], %78 {strides = array<i32>} : memref<16x64xf32, #tpu.memory_space<vmem>>, vector<16x64xf32>,
    %c0_47 = arith.constant 0 : index
    %c0_48 = arith.constant 0 : index
    %80 = vector.load %arg20[%c0_47, %c0_48] : memref<16x16xf32, #tpu.memory_space<vmem>>, vector<16x16xf32>
    tpu.vector_store %arg20[%c0_47, %c0_48], %60 {strides = array<i32>} : memref<16x16xf32, #tpu.memory_space<vmem>>, vector<16x16xf32>,
    %c0_49 = arith.constant 0 : index
    %c0_50 = arith.constant 0 : index
    %81 = vector.load %arg21[%c0_49, %c0_50] : memref<16x16xf32, #tpu.memory_space<vmem>>, vector<16x16xf32>
    tpu.vector_store %arg21[%c0_49, %c0_50], %61 {strides = array<i32>} : memref<16x16xf32, #tpu.memory_space<vmem>>, vector<16x16xf32>,
    %c0_51 = arith.constant 0 : index
    %c0_52 = arith.constant 0 : index
    %82 = vector.load %arg11[%c0_51, %c0_52] : memref<16x64xf32, #tpu.memory_space<vmem>>, vector<16x64xf32>
    %c0_53 = arith.constant 0 : index
    %c0_54 = arith.constant 0 : index
    %83 = vector.load %arg15[%c0_53, %c0_54] : memref<16x64xf32, #tpu.memory_space<vmem>>, vector<16x64xf32>
    %c0_i32_55 = arith.constant 0 : i32
    %c8_i32 = arith.constant 8 : i32
    %84 = arith.muli %c0_i32_55, %c8_i32 : i32
    %85 = tpu.assume_multiple %84, 8 : i32
    %86 = arith.index_cast %85 : i32 to index
    %c0_56 = arith.constant 0 : index
    %87 = vector.load %arg18[%86, %c0_56] : memref<16x64xf32, #tpu.memory_space<vmem>>, vector<8x64xf32>
    %88 = arith.index_cast %85 : i32 to index
    %c0_57 = arith.constant 0 : index
    %89 = vector.load %arg19[%88, %c0_57] : memref<16x64xf32, #tpu.memory_space<vmem>>, vector<8x64xf32>
    %90 = arith.index_cast %85 : i32 to index
    %c0_58 = arith.constant 0 : index
    %91 = vector.load %arg20[%90, %c0_58] : memref<16x16xf32, #tpu.memory_space<vmem>>, vector<8x16xf32>
    %92 = tpu.transpose %91, [1, 0] : vector<8x16xf32> -> vector<16x8xf32>
    %93 = arith.index_cast %85 : i32 to index
    %c0_59 = arith.constant 0 : index
    %94 = vector.load %arg21[%93, %c0_59] : memref<16x16xf32, #tpu.memory_space<vmem>>, vector<8x16xf32>
    %95 = tpu.transpose %94, [1, 0] : vector<8x16xf32> -> vector<16x8xf32>
    %96 = vector.extract_strided_slice %87 {offsets = [0, 0], sizes = [1, 64], strides = [1, 1]} : vector<8x64xf32> to vector<1x64xf32>
    %97 = vector.broadcast %96 : vector<1x64xf32> to vector<16x64xf32>
    %98 = arith.mulf %82, %97 : vector<16x64xf32>
    %99 = math.exp %98 : vector<16x64xf32>
    %100 = vector.extract_strided_slice %87 {offsets = [1, 0], sizes = [1, 64], strides = [1, 1]} : vector<8x64xf32> to vector<1x64xf32>
    %101 = vector.broadcast %100 : vector<1x64xf32> to vector<16x64xf32>
    %102 = arith.mulf %82, %101 : vector<16x64xf32>
    %103 = math.exp %102 : vector<16x64xf32>
    %104 = vector.extract_strided_slice %87 {offsets = [2, 0], sizes = [1, 64], strides = [1, 1]} : vector<8x64xf32> to vector<1x64xf32>
    %105 = vector.broadcast %104 : vector<1x64xf32> to vector<16x64xf32>
    %106 = arith.mulf %82, %105 : vector<16x64xf32>
    %107 = math.exp %106 : vector<16x64xf32>
    %108 = vector.extract_strided_slice %87 {offsets = [3, 0], sizes = [1, 64], strides = [1, 1]} : vector<8x64xf32> to vector<1x64xf32>
    %109 = vector.broadcast %108 : vector<1x64xf32> to vector<16x64xf32>
    %110 = arith.mulf %82, %109 : vector<16x64xf32>
    %111 = math.exp %110 : vector<16x64xf32>
    %112 = vector.extract_strided_slice %87 {offsets = [4, 0], sizes = [1, 64], strides = [1, 1]} : vector<8x64xf32> to vector<1x64xf32>
    %113 = vector.broadcast %112 : vector<1x64xf32> to vector<16x64xf32>
    %114 = arith.mulf %82, %113 : vector<16x64xf32>
    %115 = math.exp %114 : vector<16x64xf32>
    %116 = vector.extract_strided_slice %87 {offsets = [5, 0], sizes = [1, 64], strides = [1, 1]} : vector<8x64xf32> to vector<1x64xf32>
    %117 = vector.broadcast %116 : vector<1x64xf32> to vector<16x64xf32>
    %118 = arith.mulf %82, %117 : vector<16x64xf32>
    %119 = math.exp %118 : vector<16x64xf32>
    %120 = vector.extract_strided_slice %87 {offsets = [6, 0], sizes = [1, 64], strides = [1, 1]} : vector<8x64xf32> to vector<1x64xf32>
    %121 = vector.broadcast %120 : vector<1x64xf32> to vector<16x64xf32>
    %122 = arith.mulf %82, %121 : vector<16x64xf32>
    %123 = math.exp %122 : vector<16x64xf32>
    %124 = vector.extract_strided_slice %87 {offsets = [7, 0], sizes = [1, 64], strides = [1, 1]} : vector<8x64xf32> to vector<1x64xf32>
    %125 = vector.broadcast %124 : vector<1x64xf32> to vector<16x64xf32>
    %126 = arith.mulf %82, %125 : vector<16x64xf32>
    %127 = math.exp %126 : vector<16x64xf32>
    %128 = vector.extract_strided_slice %92 {offsets = [0, 0], sizes = [16, 1], strides = [1, 1]} : vector<16x8xf32> to vector<16x1xf32>
    %129 = vector.extract_strided_slice %89 {offsets = [0, 0], sizes = [1, 64], strides = [1, 1]} : vector<8x64xf32> to vector<1x64xf32>
    %130 = vector.broadcast %128 : vector<16x1xf32> to vector<16x64xf32>
    %131 = vector.broadcast %129 : vector<1x64xf32> to vector<16x64xf32>
    %132 = arith.mulf %130, %131 : vector<16x64xf32>
    %133 = vector.extract_strided_slice %92 {offsets = [0, 1], sizes = [16, 1], strides = [1, 1]} : vector<16x8xf32> to vector<16x1xf32>
    %134 = vector.extract_strided_slice %89 {offsets = [1, 0], sizes = [1, 64], strides = [1, 1]} : vector<8x64xf32> to vector<1x64xf32>
    %135 = vector.broadcast %133 : vector<16x1xf32> to vector<16x64xf32>
    %136 = vector.broadcast %134 : vector<1x64xf32> to vector<16x64xf32>
    %137 = arith.mulf %135, %136 : vector<16x64xf32>
    %138 = vector.extract_strided_slice %92 {offsets = [0, 2], sizes = [16, 1], strides = [1, 1]} : vector<16x8xf32> to vector<16x1xf32>
    %139 = vector.extract_strided_slice %89 {offsets = [2, 0], sizes = [1, 64], strides = [1, 1]} : vector<8x64xf32> to vector<1x64xf32>
    %140 = vector.broadcast %138 : vector<16x1xf32> to vector<16x64xf32>
    %141 = vector.broadcast %139 : vector<1x64xf32> to vector<16x64xf32>
    %142 = arith.mulf %140, %141 : vector<16x64xf32>
    %143 = vector.extract_strided_slice %92 {offsets = [0, 3], sizes = [16, 1], strides = [1, 1]} : vector<16x8xf32> to vector<16x1xf32>
    %144 = vector.extract_strided_slice %89 {offsets = [3, 0], sizes = [1, 64], strides = [1, 1]} : vector<8x64xf32> to vector<1x64xf32>
    %145 = vector.broadcast %143 : vector<16x1xf32> to vector<16x64xf32>
    %146 = vector.broadcast %144 : vector<1x64xf32> to vector<16x64xf32>
    %147 = arith.mulf %145, %146 : vector<16x64xf32>
    %148 = vector.extract_strided_slice %92 {offsets = [0, 4], sizes = [16, 1], strides = [1, 1]} : vector<16x8xf32> to vector<16x1xf32>
    %149 = vector.extract_strided_slice %89 {offsets = [4, 0], sizes = [1, 64], strides = [1, 1]} : vector<8x64xf32> to vector<1x64xf32>
    %150 = vector.broadcast %148 : vector<16x1xf32> to vector<16x64xf32>
    %151 = vector.broadcast %149 : vector<1x64xf32> to vector<16x64xf32>
    %152 = arith.mulf %150, %151 : vector<16x64xf32>
    %153 = vector.extract_strided_slice %92 {offsets = [0, 5], sizes = [16, 1], strides = [1, 1]} : vector<16x8xf32> to vector<16x1xf32>
    %154 = vector.extract_strided_slice %89 {offsets = [5, 0], sizes = [1, 64], strides = [1, 1]} : vector<8x64xf32> to vector<1x64xf32>
    %155 = vector.broadcast %153 : vector<16x1xf32> to vector<16x64xf32>
    %156 = vector.broadcast %154 : vector<1x64xf32> to vector<16x64xf32>
    %157 = arith.mulf %155, %156 : vector<16x64xf32>
    %158 = vector.extract_strided_slice %92 {offsets = [0, 6], sizes = [16, 1], strides = [1, 1]} : vector<16x8xf32> to vector<16x1xf32>
    %159 = vector.extract_strided_slice %89 {offsets = [6, 0], sizes = [1, 64], strides = [1, 1]} : vector<8x64xf32> to vector<1x64xf32>
    %160 = vector.broadcast %158 : vector<16x1xf32> to vector<16x64xf32>
    %161 = vector.broadcast %159 : vector<1x64xf32> to vector<16x64xf32>
    %162 = arith.mulf %160, %161 : vector<16x64xf32>
    %163 = vector.extract_strided_slice %92 {offsets = [0, 7], sizes = [16, 1], strides = [1, 1]} : vector<16x8xf32> to vector<16x1xf32>
    %164 = vector.extract_strided_slice %89 {offsets = [7, 0], sizes = [1, 64], strides = [1, 1]} : vector<8x64xf32> to vector<1x64xf32>
    %165 = vector.broadcast %163 : vector<16x1xf32> to vector<16x64xf32>
    %166 = vector.broadcast %164 : vector<1x64xf32> to vector<16x64xf32>
    %167 = arith.mulf %165, %166 : vector<16x64xf32>
    %168 = arith.mulf %99, %83 : vector<16x64xf32>
    %169 = arith.addf %168, %132 : vector<16x64xf32>
    %170 = vector.extract_strided_slice %95 {offsets = [0, 0], sizes = [16, 1], strides = [1, 1]} : vector<16x8xf32> to vector<16x1xf32>
    %171 = vector.broadcast %170 : vector<16x1xf32> to vector<16x64xf32>
    %172 = arith.mulf %171, %169 : vector<16x64xf32>
    %cst_60 = arith.constant dense<0.000000e+00> : vector<64xf32>
    %173 = vector.multi_reduction <add>, %172, %cst_60 [0] : vector<16x64xf32> to vector<64xf32>
    %174 = vector.shape_cast %173 : vector<64xf32> to vector<1x64xf32>
    %175 = arith.mulf %103, %169 : vector<16x64xf32>
    %176 = arith.addf %175, %137 : vector<16x64xf32>
    %177 = vector.extract_strided_slice %95 {offsets = [0, 1], sizes = [16, 1], strides = [1, 1]} : vector<16x8xf32> to vector<16x1xf32>
    %178 = vector.broadcast %177 : vector<16x1xf32> to vector<16x64xf32>
    %179 = arith.mulf %178, %176 : vector<16x64xf32>
    %cst_61 = arith.constant dense<0.000000e+00> : vector<64xf32>
    %180 = vector.multi_reduction <add>, %179, %cst_61 [0] : vector<16x64xf32> to vector<64xf32>
    %181 = vector.shape_cast %180 : vector<64xf32> to vector<1x64xf32>
    %182 = arith.mulf %107, %176 : vector<16x64xf32>
    %183 = arith.addf %182, %142 : vector<16x64xf32>
    %184 = vector.extract_strided_slice %95 {offsets = [0, 2], sizes = [16, 1], strides = [1, 1]} : vector<16x8xf32> to vector<16x1xf32>
    %185 = vector.broadcast %184 : vector<16x1xf32> to vector<16x64xf32>
    %186 = arith.mulf %185, %183 : vector<16x64xf32>
    %cst_62 = arith.constant dense<0.000000e+00> : vector<64xf32>
    %187 = vector.multi_reduction <add>, %186, %cst_62 [0] : vector<16x64xf32> to vector<64xf32>
    %188 = vector.shape_cast %187 : vector<64xf32> to vector<1x64xf32>
    %189 = arith.mulf %111, %183 : vector<16x64xf32>
    %190 = arith.addf %189, %147 : vector<16x64xf32>
    %191 = vector.extract_strided_slice %95 {offsets = [0, 3], sizes = [16, 1], strides = [1, 1]} : vector<16x8xf32> to vector<16x1xf32>
    %192 = vector.broadcast %191 : vector<16x1xf32> to vector<16x64xf32>
    %193 = arith.mulf %192, %190 : vector<16x64xf32>
    %cst_63 = arith.constant dense<0.000000e+00> : vector<64xf32>
    %194 = vector.multi_reduction <add>, %193, %cst_63 [0] : vector<16x64xf32> to vector<64xf32>
    %195 = vector.shape_cast %194 : vector<64xf32> to vector<1x64xf32>
    %196 = arith.mulf %115, %190 : vector<16x64xf32>
    %197 = arith.addf %196, %152 : vector<16x64xf32>
    %198 = vector.extract_strided_slice %95 {offsets = [0, 4], sizes = [16, 1], strides = [1, 1]} : vector<16x8xf32> to vector<16x1xf32>
    %199 = vector.broadcast %198 : vector<16x1xf32> to vector<16x64xf32>
    %200 = arith.mulf %199, %197 : vector<16x64xf32>
    %cst_64 = arith.constant dense<0.000000e+00> : vector<64xf32>
    %201 = vector.multi_reduction <add>, %200, %cst_64 [0] : vector<16x64xf32> to vector<64xf32>
    %202 = vector.shape_cast %201 : vector<64xf32> to vector<1x64xf32>
    %203 = arith.mulf %119, %197 : vector<16x64xf32>
    %204 = arith.addf %203, %157 : vector<16x64xf32>
    %205 = vector.extract_strided_slice %95 {offsets = [0, 5], sizes = [16, 1], strides = [1, 1]} : vector<16x8xf32> to vector<16x1xf32>
    %206 = vector.broadcast %205 : vector<16x1xf32> to vector<16x64xf32>
    %207 = arith.mulf %206, %204 : vector<16x64xf32>
    %cst_65 = arith.constant dense<0.000000e+00> : vector<64xf32>
    %208 = vector.multi_reduction <add>, %207, %cst_65 [0] : vector<16x64xf32> to vector<64xf32>
    %209 = vector.shape_cast %208 : vector<64xf32> to vector<1x64xf32>
    %210 = arith.mulf %123, %204 : vector<16x64xf32>
    %211 = arith.addf %210, %162 : vector<16x64xf32>
    %212 = vector.extract_strided_slice %95 {offsets = [0, 6], sizes = [16, 1], strides = [1, 1]} : vector<16x8xf32> to vector<16x1xf32>
    %213 = vector.broadcast %212 : vector<16x1xf32> to vector<16x64xf32>
    %214 = arith.mulf %213, %211 : vector<16x64xf32>
    %cst_66 = arith.constant dense<0.000000e+00> : vector<64xf32>
    %215 = vector.multi_reduction <add>, %214, %cst_66 [0] : vector<16x64xf32> to vector<64xf32>
    %216 = vector.shape_cast %215 : vector<64xf32> to vector<1x64xf32>
    %217 = arith.mulf %127, %211 : vector<16x64xf32>
    %218 = arith.addf %217, %167 : vector<16x64xf32>
    %219 = vector.extract_strided_slice %95 {offsets = [0, 7], sizes = [16, 1], strides = [1, 1]} : vector<16x8xf32> to vector<16x1xf32>
    %220 = vector.broadcast %219 : vector<16x1xf32> to vector<16x64xf32>
    %221 = arith.mulf %220, %218 : vector<16x64xf32>
    %cst_67 = arith.constant dense<0.000000e+00> : vector<64xf32>
    %222 = vector.multi_reduction <add>, %221, %cst_67 [0] : vector<16x64xf32> to vector<64xf32>
    %223 = vector.shape_cast %222 : vector<64xf32> to vector<1x64xf32>
    %224 = tpu.concatenate %174, %181, %188, %195, %202, %209, %216, %223 in 0 : vector<1x64xf32>, vector<1x64xf32>, vector<1x64xf32>, vector<1x64xf32>, vector<1x64xf32>, vector<1x64xf32>, vector<1x64xf32>, vector<1x64xf32> -> vector<8x64xf32>
    %225 = arith.index_cast %85 : i32 to index
    %c0_68 = arith.constant 0 : index
    %226 = vector.load %arg17[%225, %c0_68] : memref<16x64xf32, #tpu.memory_space<vmem>>, vector<8x64xf32>
    tpu.vector_store %arg17[%225, %c0_68], %224 {strides = array<i32>} : memref<16x64xf32, #tpu.memory_space<vmem>>, vector<8x64xf32>,
    %c1_i32 = arith.constant 1 : i32
    %c8_i32_69 = arith.constant 8 : i32
    %227 = arith.muli %c1_i32, %c8_i32_69 : i32
    %228 = tpu.assume_multiple %227, 8 : i32
    %229 = arith.index_cast %228 : i32 to index
    %c0_70 = arith.constant 0 : index
    %230 = vector.load %arg18[%229, %c0_70] : memref<16x64xf32, #tpu.memory_space<vmem>>, vector<8x64xf32>
    %231 = arith.index_cast %228 : i32 to index
    %c0_71 = arith.constant 0 : index
    %232 = vector.load %arg19[%231, %c0_71] : memref<16x64xf32, #tpu.memory_space<vmem>>, vector<8x64xf32>
    %233 = arith.index_cast %228 : i32 to index
    %c0_72 = arith.constant 0 : index
    %234 = vector.load %arg20[%233, %c0_72] : memref<16x16xf32, #tpu.memory_space<vmem>>, vector<8x16xf32>
    %235 = tpu.transpose %234, [1, 0] : vector<8x16xf32> -> vector<16x8xf32>
    %236 = arith.index_cast %228 : i32 to index
    %c0_73 = arith.constant 0 : index
    %237 = vector.load %arg21[%236, %c0_73] : memref<16x16xf32, #tpu.memory_space<vmem>>, vector<8x16xf32>
    %238 = tpu.transpose %237, [1, 0] : vector<8x16xf32> -> vector<16x8xf32>
    %239 = vector.extract_strided_slice %230 {offsets = [0, 0], sizes = [1, 64], strides = [1, 1]} : vector<8x64xf32> to vector<1x64xf32>
    %240 = vector.broadcast %239 : vector<1x64xf32> to vector<16x64xf32>
    %241 = arith.mulf %82, %240 : vector<16x64xf32>
    %242 = math.exp %241 : vector<16x64xf32>
    %243 = vector.extract_strided_slice %230 {offsets = [1, 0], sizes = [1, 64], strides = [1, 1]} : vector<8x64xf32> to vector<1x64xf32>
    %244 = vector.broadcast %243 : vector<1x64xf32> to vector<16x64xf32>
    %245 = arith.mulf %82, %244 : vector<16x64xf32>
    %246 = math.exp %245 : vector<16x64xf32>
    %247 = vector.extract_strided_slice %230 {offsets = [2, 0], sizes = [1, 64], strides = [1, 1]} : vector<8x64xf32> to vector<1x64xf32>
    %248 = vector.broadcast %247 : vector<1x64xf32> to vector<16x64xf32>
    %249 = arith.mulf %82, %248 : vector<16x64xf32>
    %250 = math.exp %249 : vector<16x64xf32>
    %251 = vector.extract_strided_slice %230 {offsets = [3, 0], sizes = [1, 64], strides = [1, 1]} : vector<8x64xf32> to vector<1x64xf32>
    %252 = vector.broadcast %251 : vector<1x64xf32> to vector<16x64xf32>
    %253 = arith.mulf %82, %252 : vector<16x64xf32>
    %254 = math.exp %253 : vector<16x64xf32>
    %255 = vector.extract_strided_slice %230 {offsets = [4, 0], sizes = [1, 64], strides = [1, 1]} : vector<8x64xf32> to vector<1x64xf32>
    %256 = vector.broadcast %255 : vector<1x64xf32> to vector<16x64xf32>
    %257 = arith.mulf %82, %256 : vector<16x64xf32>
    %258 = math.exp %257 : vector<16x64xf32>
    %259 = vector.extract_strided_slice %230 {offsets = [5, 0], sizes = [1, 64], strides = [1, 1]} : vector<8x64xf32> to vector<1x64xf32>
    %260 = vector.broadcast %259 : vector<1x64xf32> to vector<16x64xf32>
    %261 = arith.mulf %82, %260 : vector<16x64xf32>
    %262 = math.exp %261 : vector<16x64xf32>
    %263 = vector.extract_strided_slice %230 {offsets = [6, 0], sizes = [1, 64], strides = [1, 1]} : vector<8x64xf32> to vector<1x64xf32>
    %264 = vector.broadcast %263 : vector<1x64xf32> to vector<16x64xf32>
    %265 = arith.mulf %82, %264 : vector<16x64xf32>
    %266 = math.exp %265 : vector<16x64xf32>
    %267 = vector.extract_strided_slice %230 {offsets = [7, 0], sizes = [1, 64], strides = [1, 1]} : vector<8x64xf32> to vector<1x64xf32>
    %268 = vector.broadcast %267 : vector<1x64xf32> to vector<16x64xf32>
    %269 = arith.mulf %82, %268 : vector<16x64xf32>
    %270 = math.exp %269 : vector<16x64xf32>
    %271 = vector.extract_strided_slice %235 {offsets = [0, 0], sizes = [16, 1], strides = [1, 1]} : vector<16x8xf32> to vector<16x1xf32>
    %272 = vector.extract_strided_slice %232 {offsets = [0, 0], sizes = [1, 64], strides = [1, 1]} : vector<8x64xf32> to vector<1x64xf32>
    %273 = vector.broadcast %271 : vector<16x1xf32> to vector<16x64xf32>
    %274 = vector.broadcast %272 : vector<1x64xf32> to vector<16x64xf32>
    %275 = arith.mulf %273, %274 : vector<16x64xf32>
    %276 = vector.extract_strided_slice %235 {offsets = [0, 1], sizes = [16, 1], strides = [1, 1]} : vector<16x8xf32> to vector<16x1xf32>
    %277 = vector.extract_strided_slice %232 {offsets = [1, 0], sizes = [1, 64], strides = [1, 1]} : vector<8x64xf32> to vector<1x64xf32>
    %278 = vector.broadcast %276 : vector<16x1xf32> to vector<16x64xf32>
    %279 = vector.broadcast %277 : vector<1x64xf32> to vector<16x64xf32>
    %280 = arith.mulf %278, %279 : vector<16x64xf32>
    %281 = vector.extract_strided_slice %235 {offsets = [0, 2], sizes = [16, 1], strides = [1, 1]} : vector<16x8xf32> to vector<16x1xf32>
    %282 = vector.extract_strided_slice %232 {offsets = [2, 0], sizes = [1, 64], strides = [1, 1]} : vector<8x64xf32> to vector<1x64xf32>
    %283 = vector.broadcast %281 : vector<16x1xf32> to vector<16x64xf32>
    %284 = vector.broadcast %282 : vector<1x64xf32> to vector<16x64xf32>
    %285 = arith.mulf %283, %284 : vector<16x64xf32>
    %286 = vector.extract_strided_slice %235 {offsets = [0, 3], sizes = [16, 1], strides = [1, 1]} : vector<16x8xf32> to vector<16x1xf32>
    %287 = vector.extract_strided_slice %232 {offsets = [3, 0], sizes = [1, 64], strides = [1, 1]} : vector<8x64xf32> to vector<1x64xf32>
    %288 = vector.broadcast %286 : vector<16x1xf32> to vector<16x64xf32>
    %289 = vector.broadcast %287 : vector<1x64xf32> to vector<16x64xf32>
    %290 = arith.mulf %288, %289 : vector<16x64xf32>
    %291 = vector.extract_strided_slice %235 {offsets = [0, 4], sizes = [16, 1], strides = [1, 1]} : vector<16x8xf32> to vector<16x1xf32>
    %292 = vector.extract_strided_slice %232 {offsets = [4, 0], sizes = [1, 64], strides = [1, 1]} : vector<8x64xf32> to vector<1x64xf32>
    %293 = vector.broadcast %291 : vector<16x1xf32> to vector<16x64xf32>
    %294 = vector.broadcast %292 : vector<1x64xf32> to vector<16x64xf32>
    %295 = arith.mulf %293, %294 : vector<16x64xf32>
    %296 = vector.extract_strided_slice %235 {offsets = [0, 5], sizes = [16, 1], strides = [1, 1]} : vector<16x8xf32> to vector<16x1xf32>
    %297 = vector.extract_strided_slice %232 {offsets = [5, 0], sizes = [1, 64], strides = [1, 1]} : vector<8x64xf32> to vector<1x64xf32>
    %298 = vector.broadcast %296 : vector<16x1xf32> to vector<16x64xf32>
    %299 = vector.broadcast %297 : vector<1x64xf32> to vector<16x64xf32>
    %300 = arith.mulf %298, %299 : vector<16x64xf32>
    %301 = vector.extract_strided_slice %235 {offsets = [0, 6], sizes = [16, 1], strides = [1, 1]} : vector<16x8xf32> to vector<16x1xf32>
    %302 = vector.extract_strided_slice %232 {offsets = [6, 0], sizes = [1, 64], strides = [1, 1]} : vector<8x64xf32> to vector<1x64xf32>
    %303 = vector.broadcast %301 : vector<16x1xf32> to vector<16x64xf32>
    %304 = vector.broadcast %302 : vector<1x64xf32> to vector<16x64xf32>
    %305 = arith.mulf %303, %304 : vector<16x64xf32>
    %306 = vector.extract_strided_slice %235 {offsets = [0, 7], sizes = [16, 1], strides = [1, 1]} : vector<16x8xf32> to vector<16x1xf32>
    %307 = vector.extract_strided_slice %232 {offsets = [7, 0], sizes = [1, 64], strides = [1, 1]} : vector<8x64xf32> to vector<1x64xf32>
    %308 = vector.broadcast %306 : vector<16x1xf32> to vector<16x64xf32>
    %309 = vector.broadcast %307 : vector<1x64xf32> to vector<16x64xf32>
    %310 = arith.mulf %308, %309 : vector<16x64xf32>
    %311 = arith.mulf %242, %218 : vector<16x64xf32>
    %312 = arith.addf %311, %275 : vector<16x64xf32>
    %313 = vector.extract_strided_slice %238 {offsets = [0, 0], sizes = [16, 1], strides = [1, 1]} : vector<16x8xf32> to vector<16x1xf32>
    %314 = vector.broadcast %313 : vector<16x1xf32> to vector<16x64xf32>
    %315 = arith.mulf %314, %312 : vector<16x64xf32>
    %cst_74 = arith.constant dense<0.000000e+00> : vector<64xf32>
    %316 = vector.multi_reduction <add>, %315, %cst_74 [0] : vector<16x64xf32> to vector<64xf32>
    %317 = vector.shape_cast %316 : vector<64xf32> to vector<1x64xf32>
    %318 = arith.mulf %246, %312 : vector<16x64xf32>
    %319 = arith.addf %318, %280 : vector<16x64xf32>
    %320 = vector.extract_strided_slice %238 {offsets = [0, 1], sizes = [16, 1], strides = [1, 1]} : vector<16x8xf32> to vector<16x1xf32>
    %321 = vector.broadcast %320 : vector<16x1xf32> to vector<16x64xf32>
    %322 = arith.mulf %321, %319 : vector<16x64xf32>
    %cst_75 = arith.constant dense<0.000000e+00> : vector<64xf32>
    %323 = vector.multi_reduction <add>, %322, %cst_75 [0] : vector<16x64xf32> to vector<64xf32>
    %324 = vector.shape_cast %323 : vector<64xf32> to vector<1x64xf32>
    %325 = arith.mulf %250, %319 : vector<16x64xf32>
    %326 = arith.addf %325, %285 : vector<16x64xf32>
    %327 = vector.extract_strided_slice %238 {offsets = [0, 2], sizes = [16, 1], strides = [1, 1]} : vector<16x8xf32> to vector<16x1xf32>
    %328 = vector.broadcast %327 : vector<16x1xf32> to vector<16x64xf32>
    %329 = arith.mulf %328, %326 : vector<16x64xf32>
    %cst_76 = arith.constant dense<0.000000e+00> : vector<64xf32>
    %330 = vector.multi_reduction <add>, %329, %cst_76 [0] : vector<16x64xf32> to vector<64xf32>
    %331 = vector.shape_cast %330 : vector<64xf32> to vector<1x64xf32>
    %332 = arith.mulf %254, %326 : vector<16x64xf32>
    %333 = arith.addf %332, %290 : vector<16x64xf32>
    %334 = vector.extract_strided_slice %238 {offsets = [0, 3], sizes = [16, 1], strides = [1, 1]} : vector<16x8xf32> to vector<16x1xf32>
    %335 = vector.broadcast %334 : vector<16x1xf32> to vector<16x64xf32>
    %336 = arith.mulf %335, %333 : vector<16x64xf32>
    %cst_77 = arith.constant dense<0.000000e+00> : vector<64xf32>
    %337 = vector.multi_reduction <add>, %336, %cst_77 [0] : vector<16x64xf32> to vector<64xf32>
    %338 = vector.shape_cast %337 : vector<64xf32> to vector<1x64xf32>
    %339 = arith.mulf %258, %333 : vector<16x64xf32>
    %340 = arith.addf %339, %295 : vector<16x64xf32>
    %341 = vector.extract_strided_slice %238 {offsets = [0, 4], sizes = [16, 1], strides = [1, 1]} : vector<16x8xf32> to vector<16x1xf32>
    %342 = vector.broadcast %341 : vector<16x1xf32> to vector<16x64xf32>
    %343 = arith.mulf %342, %340 : vector<16x64xf32>
    %cst_78 = arith.constant dense<0.000000e+00> : vector<64xf32>
    %344 = vector.multi_reduction <add>, %343, %cst_78 [0] : vector<16x64xf32> to vector<64xf32>
    %345 = vector.shape_cast %344 : vector<64xf32> to vector<1x64xf32>
    %346 = arith.mulf %262, %340 : vector<16x64xf32>
    %347 = arith.addf %346, %300 : vector<16x64xf32>
    %348 = vector.extract_strided_slice %238 {offsets = [0, 5], sizes = [16, 1], strides = [1, 1]} : vector<16x8xf32> to vector<16x1xf32>
    %349 = vector.broadcast %348 : vector<16x1xf32> to vector<16x64xf32>
    %350 = arith.mulf %349, %347 : vector<16x64xf32>
    %cst_79 = arith.constant dense<0.000000e+00> : vector<64xf32>
    %351 = vector.multi_reduction <add>, %350, %cst_79 [0] : vector<16x64xf32> to vector<64xf32>
    %352 = vector.shape_cast %351 : vector<64xf32> to vector<1x64xf32>
    %353 = arith.mulf %266, %347 : vector<16x64xf32>
    %354 = arith.addf %353, %305 : vector<16x64xf32>
    %355 = vector.extract_strided_slice %238 {offsets = [0, 6], sizes = [16, 1], strides = [1, 1]} : vector<16x8xf32> to vector<16x1xf32>
    %356 = vector.broadcast %355 : vector<16x1xf32> to vector<16x64xf32>
    %357 = arith.mulf %356, %354 : vector<16x64xf32>
    %cst_80 = arith.constant dense<0.000000e+00> : vector<64xf32>
    %358 = vector.multi_reduction <add>, %357, %cst_80 [0] : vector<16x64xf32> to vector<64xf32>
    %359 = vector.shape_cast %358 : vector<64xf32> to vector<1x64xf32>
    %360 = arith.mulf %270, %354 : vector<16x64xf32>
    %361 = arith.addf %360, %310 : vector<16x64xf32>
    %362 = vector.extract_strided_slice %238 {offsets = [0, 7], sizes = [16, 1], strides = [1, 1]} : vector<16x8xf32> to vector<16x1xf32>
    %363 = vector.broadcast %362 : vector<16x1xf32> to vector<16x64xf32>
    %364 = arith.mulf %363, %361 : vector<16x64xf32>
    %cst_81 = arith.constant dense<0.000000e+00> : vector<64xf32>
    %365 = vector.multi_reduction <add>, %364, %cst_81 [0] : vector<16x64xf32> to vector<64xf32>
    %366 = vector.shape_cast %365 : vector<64xf32> to vector<1x64xf32>
    %367 = tpu.concatenate %317, %324, %331, %338, %345, %352, %359, %366 in 0 : vector<1x64xf32>, vector<1x64xf32>, vector<1x64xf32>, vector<1x64xf32>, vector<1x64xf32>, vector<1x64xf32>, vector<1x64xf32>, vector<1x64xf32> -> vector<8x64xf32>
    %368 = arith.index_cast %228 : i32 to index
    %c0_82 = arith.constant 0 : index
    %369 = vector.load %arg17[%368, %c0_82] : memref<16x64xf32, #tpu.memory_space<vmem>>, vector<8x64xf32>
    tpu.vector_store %arg17[%368, %c0_82], %367 {strides = array<i32>} : memref<16x64xf32, #tpu.memory_space<vmem>>, vector<8x64xf32>,
    %c2_i32 = arith.constant 2 : i32
    %c0_83 = arith.constant 0 : index
    %c0_84 = arith.constant 0 : index
    %370 = vector.load %arg15[%c0_83, %c0_84] : memref<16x64xf32, #tpu.memory_space<vmem>>, vector<16x64xf32>
    tpu.vector_store %arg15[%c0_83, %c0_84], %361 {strides = array<i32>} : memref<16x64xf32, #tpu.memory_space<vmem>>, vector<16x64xf32>,
    %c0_85 = arith.constant 0 : index
    %c0_86 = arith.constant 0 : index
    %371 = vector.load %arg17[%c0_85, %c0_86] : memref<16x64xf32, #tpu.memory_space<vmem>>, vector<16x64xf32>
    %c0_87 = arith.constant 0 : index
    %c0_88 = arith.constant 0 : index
    %372 = vector.load %arg12[%c0_87, %c0_88] : memref<1x64xf32, #tpu.memory_space<vmem>>, vector<1x64xf32>
    %373 = vector.broadcast %372 : vector<1x64xf32> to vector<16x64xf32>
    %374 = arith.mulf %55, %373 : vector<16x64xf32>
    %375 = arith.addf %371, %374 : vector<16x64xf32>
    %cst_89 = arith.constant 0.000000e+00 : f32
    %376 = vector.broadcast %cst_89 : f32 to vector<16x64xf32>
    %377 = arith.subf %376, %22 : vector<16x64xf32>
    %378 = math.exp %377 : vector<16x64xf32>
    %cst_90 = arith.constant 1.000000e+00 : f32
    %379 = vector.broadcast %cst_90 : f32 to vector<16x64xf32>
    %380 = arith.addf %379, %378 : vector<16x64xf32>
    %cst_91 = arith.constant 1.000000e+00 : f32
    %381 = vector.broadcast %cst_91 : f32 to vector<16x64xf32>
    %382 = arith.divf %381, %380 : vector<16x64xf32>
    %383 = arith.mulf %22, %382 : vector<16x64xf32>
    %384 = arith.mulf %375, %383 : vector<16x64xf32>
    %385 = arith.truncf %384 : vector<16x64xf32> to vector<16x64xbf16>
    %c0_92 = arith.constant 0 : index
    %c0_93 = arith.constant 0 : index
    %386 = vector.load %arg13[%c0_92, %c0_93] : memref<64x32xbf16, #tpu.memory_space<vmem>>, vector<64x32xbf16>
    %cst_94 = arith.constant dense<0.000000e+00> : vector<16x32xf32>
    %387 = tpu.matmul %385, %386, %cst_94 {dimension_numbers = #tpu.dot_dimension_numbers<[1], [0], [0], [1], [0, 0, 1, 1], [], []>} : vector<16x64xbf16>, vector<64x32xbf16>, vector<16x32xf32> -> vector<16x32xf32>
    %c0_95 = arith.constant 0 : index
    %c0_96 = arith.constant 0 : index
    %c0_97 = arith.constant 0 : index
    %388 = vector.load %arg2[%c0_95, %c0_96, %c0_97] : memref<1x16x32xf32, #tpu.memory_space<vmem>>, vector<1x16x32xf32>
    %389 = vector.shape_cast %388 : vector<1x16x32xf32> to vector<16x32xf32>
    %390 = arith.addf %389, %387 : vector<16x32xf32>
    %c0_98 = arith.constant 0 : index
    %c0_99 = arith.constant 0 : index
    %c0_100 = arith.constant 0 : index
    %391 = vector.load %arg14[%c0_98, %c0_99, %c0_100] : memref<1x16x32xf32, #tpu.memory_space<vmem>>, vector<1x16x32xf32>
    %392 = vector.shape_cast %391 : vector<1x16x32xf32> to vector<16x32xf32>
    %393 = vector.shape_cast %390 : vector<16x32xf32> to vector<1x16x32xf32>
    tpu.vector_store %arg14[%c0_98, %c0_99, %c0_100], %393 {strides = array<i32>} : memref<1x16x32xf32, #tpu.memory_space<vmem>>, vector<1x16x32xf32>,
    return
  }
  func.func @transform_0(%arg0: i32, %arg1: i32) -> (i32, i32, i32) {
    %c0_i32 = arith.constant 0 : i32
    %c0_i32_0 = arith.constant 0 : i32
    return %arg0, %arg1, %c0_i32 : i32, i32, i32
  }
  func.func @transform_1(%arg0: i32, %arg1: i32) -> (i32, i32) {
    %c0_i32 = arith.constant 0 : i32
    %c0_i32_0 = arith.constant 0 : i32
    %c0_i32_1 = arith.constant 0 : i32
    return %c0_i32, %c0_i32_0 : i32, i32
  }
  func.func @transform_2(%arg0: i32, %arg1: i32) -> (i32, i32) {
    %c0_i32 = arith.constant 0 : i32
    %c0_i32_0 = arith.constant 0 : i32
    %c0_i32_1 = arith.constant 0 : i32
    return %c0_i32, %c0_i32_0 : i32, i32
  }
  func.func @transform_3(%arg0: i32, %arg1: i32) -> (i32, i32) {
    %c0_i32 = arith.constant 0 : i32
    %c0_i32_0 = arith.constant 0 : i32
    %c0_i32_1 = arith.constant 0 : i32
    return %c0_i32, %c0_i32_0 : i32, i32
  }
  func.func @transform_4(%arg0: i32, %arg1: i32) -> (i32, i32) {
    %c0_i32 = arith.constant 0 : i32
    %c0_i32_0 = arith.constant 0 : i32
    %c0_i32_1 = arith.constant 0 : i32
    return %c0_i32, %c0_i32_0 : i32, i32
  }
  func.func @transform_5(%arg0: i32, %arg1: i32) -> (i32, i32) {
    %c0_i32 = arith.constant 0 : i32
    %c0_i32_0 = arith.constant 0 : i32
    %c0_i32_1 = arith.constant 0 : i32
    return %c0_i32, %c0_i32_0 : i32, i32
  }
  func.func @transform_6(%arg0: i32, %arg1: i32) -> (i32, i32) {
    %c0_i32 = arith.constant 0 : i32
    %c0_i32_0 = arith.constant 0 : i32
    %c0_i32_1 = arith.constant 0 : i32
    return %c0_i32, %c0_i32_0 : i32, i32
  }
  func.func @transform_7(%arg0: i32, %arg1: i32) -> (i32, i32) {
    %c0_i32 = arith.constant 0 : i32
    %c0_i32_0 = arith.constant 0 : i32
    %c0_i32_1 = arith.constant 0 : i32
    return %c0_i32, %c0_i32_0 : i32, i32
  }
  func.func @transform_8(%arg0: i32, %arg1: i32) -> (i32, i32) {
    %c0_i32 = arith.constant 0 : i32
    %c0_i32_0 = arith.constant 0 : i32
    %c0_i32_1 = arith.constant 0 : i32
    return %c0_i32, %c0_i32_0 : i32, i32
  }
  func.func @transform_9(%arg0: i32, %arg1: i32) -> (i32, i32) {
    %c0_i32 = arith.constant 0 : i32
    %c0_i32_0 = arith.constant 0 : i32
    %c0_i32_1 = arith.constant 0 : i32
    return %c0_i32, %c0_i32_0 : i32, i32
  }
  func.func @transform_10(%arg0: i32, %arg1: i32) -> (i32, i32) {
    %c0_i32 = arith.constant 0 : i32
    %c0_i32_0 = arith.constant 0 : i32
    %c0_i32_1 = arith.constant 0 : i32
    return %c0_i32, %c0_i32_0 : i32, i32
  }
  func.func @transform_11(%arg0: i32, %arg1: i32) -> (i32, i32) {
    %c0_i32 = arith.constant 0 : i32
    %c0_i32_0 = arith.constant 0 : i32
    %c0_i32_1 = arith.constant 0 : i32
    return %c0_i32, %c0_i32_0 : i32, i32
  }
  func.func @transform_12(%arg0: i32, %arg1: i32) -> (i32, i32, i32) {
    %c0_i32 = arith.constant 0 : i32
    %c0_i32_0 = arith.constant 0 : i32
    return %arg0, %arg1, %c0_i32 : i32, i32, i32
  }
}

</mosaic_0001>

<llo_original>
// kernel: tpu_custom_call.1
$region0: #{tpu_custom_call.1}
  #allocation0 [shape = 'u32[]', space=smem, size = 0x4, offset = 0x4, fixed_abs, tag = 'smem constant byte address 0x4 - core index']
  #allocation1 [shape = 'u32[72,128]{1,0:T(1,128)}', space=vmem, size = 0x9000, scoped, tag = 'internal scratch']
  #allocation2 [shape = 'f32[16,64]{1,0:T(8,128)}', space=vmem, size = 0x2000, scoped, tag = 'scratch operand']
  #allocation3 [shape = 'f32[24,64]{1,0:T(8,128)}', space=vmem, size = 0x3000, scoped, tag = 'scratch operand']
  #allocation4 [shape = 'f32[16,64]{1,0:T(8,128)}', space=vmem, size = 0x2000, scoped, tag = 'scratch operand']
  #allocation5 [shape = 'f32[16,64]{1,0:T(8,128)}', space=vmem, size = 0x2000, scoped, tag = 'scratch operand']
  #allocation6 [shape = 'f32[16,64]{1,0:T(8,128)}', space=vmem, size = 0x2000, scoped, tag = 'scratch operand']
  #allocation7 [shape = 'f32[16,16]{1,0:T(8,128)}', space=vmem, size = 0x2000, scoped, tag = 'scratch operand']
  #allocation8 [shape = 'f32[16,16]{1,0:T(8,128)}', space=vmem, size = 0x2000, scoped, tag = 'scratch operand']
  %s0 = inlined_call_operand.vmem [shape: f32[2,32,32], index: 0, kind: input, shape index: {}]
  %s1 = inlined_call_operand.hbm [shape: f32[1,32], index: 1, kind: input, shape index: {}]
  %s2 = inlined_call_operand.vmem [shape: bf16[32,64], index: 2, kind: input, shape index: {}]
  %s3 = inlined_call_operand.hbm [shape: bf16[32,64], index: 3, kind: input, shape index: {}]
  %s4 = inlined_call_operand.vmem [shape: f32[4,64], index: 4, kind: input, shape index: {}]
  %s5 = inlined_call_operand.vmem [shape: f32[1,64], index: 5, kind: input, shape index: {}]
  %s6 = inlined_call_operand.vmem [shape: bf16[64,34], index: 6, kind: input, shape index: {}]
  %s7 = inlined_call_operand.vmem [shape: bf16[2,64], index: 7, kind: input, shape index: {}]
  %s8 = inlined_call_operand.vmem [shape: f32[1,64], index: 8, kind: input, shape index: {}]
  %s9 = inlined_call_operand.hbm [shape: f32[16,64], index: 9, kind: input, shape index: {}]
  %s10 = inlined_call_operand.vmem [shape: f32[1,64], index: 10, kind: input, shape index: {}]
  %s11 = inlined_call_operand.vmem [shape: bf16[64,32], index: 11, kind: input, shape index: {}]
  %s12 = inlined_call_operand.hbm [shape: f32[2,32,32], index: 12, kind: output, shape index: {}]
  %s13 = sld [smem:[#allocation0]]
  $region97: #{tpu_custom_call.1} parent=0
    _
  %s15 = ssub.s32 1, %s13
  %s16 = scalar_select 0, %s15, %s13
  $region1: #{tpu_custom_call.1} parent=0
    #allocation9 [shape = 'u8[512]{0}', space=vmem, size = 0x400, scoped, tag = 'input window, operand 1, single buffered']
    #allocation10 [shape = 's32[2]{0}', space=sflag, size = 0x8, scoped, tag = 'scoped memory for tpu_custom_call.1']
    #allocation11 [shape = 's32[2]{0}', space=sflag, size = 0x8, scoped, tag = 'scoped memory for tpu_custom_call.1']
    #allocation12 [shape = 'u8[8192]{0}', space=vmem, size = 0x2000, scoped, tag = 'input window, operand 3, single buffered']
    #allocation13 [shape = 's32[1]{0}', space=sflag, size = 0x4, scoped, tag = 'scoped memory for tpu_custom_call.1']
    #allocation14 [shape = 'u8[8192]{0}', space=vmem, size = 0x2000, scoped, tag = 'input window, operand 9, single buffered']
    #allocation15 [shape = 'u8[16384]{0}', space=vmem, size = 0x4000, scoped, tag = 'output window, operand 0']
    %17 = vsyncpa [#allocation10], 0
    %18 = vsyncpa [#allocation13], 0
    %19 = vsyncpa [#allocation11], 0
    %s20 = scalar_lea.sflag [#allocation11], 1
    %21 = vsyncpa %s20, 0
    loop: start=0, step=1, limit=6
    $region2: #{tpu_custom_call.1} parent=1 // loop_pre_header
      _
    $region3: #{tpu_custom_call.1} parent=1 // loop_header
      %s23 = sphi 0, %s27
      %p24 = scmp.ge.s32.totalorder %s23, 6
      %s30 = sphi 0, %s42
      %s31 = sphi 0, %s38
      %s32 = sphi 0, %s30
      %s33 = sphi 0, %s31
      %s34 = sphi 0, %s32
      %s35 = sphi 0, %s33
      %s47 = sphi 0, %s49
      %s50 = sphi 0, %s47
      %s51 = sphi 0, %s50
      %s67 = sphi 0, %s51
      %s71 = sphi 0, %s71
      %s73 = sphi 0, %s71
      %s74 = sphi 0, %s73
      %s88 = sphi 0, %s74
      %s92 = sphi 0, %s92
      %s94 = sphi 0, %s92
      %s95 = sphi 0, %s94
      %s109 = sphi 0, %s95
      %s113 = sphi 0, %s113
      %s115 = sphi 0, %s113
      %s116 = sphi 0, %s115
      %s130 = sphi 0, %s116
      %s134 = sphi 0, %s134
      %s136 = sphi 0, %s134
      %s137 = sphi 0, %s136
      %s151 = sphi 0, %s137
      %s155 = sphi 0, %s155
      %s157 = sphi 0, %s155
      %s158 = sphi 0, %s157
      %s172 = sphi 0, %s158
      %s176 = sphi 0, %s176
      %s178 = sphi 0, %s176
      %s179 = sphi 0, %s178
      %s193 = sphi 0, %s179
      %s197 = sphi 0, %s197
      %s199 = sphi 0, %s197
      %s200 = sphi 0, %s199
      %s214 = sphi 0, %s200
      %s218 = sphi 0, %s218
      %s220 = sphi 0, %s218
      %s221 = sphi 0, %s220
      %s235 = sphi 0, %s221
      %s239 = sphi 0, %s239
      %s241 = sphi 0, %s239
      %s242 = sphi 0, %s241
      %s256 = sphi 0, %s242
      %s260 = sphi 0, %s260
      %s262 = sphi 0, %s260
      %s263 = sphi 0, %s262
      %s277 = sphi 0, %s263
      %s281 = sphi 0, %s281
      %s283 = sphi 0, %s281
      %s284 = sphi 0, %s283
      %s298 = sphi 0, %s284
      %s306 = sphi 0, %s308
      %s309 = sphi 0, %s306
      %s310 = sphi 0, %s309
      %s326 = sphi 0, %s310
    $region4: #{tpu_custom_call.1} parent=1 // loop_header_branch
      %26 = sbr.rel (%p24) target = $region8
    $region5: #{tpu_custom_call.1} parent=1 // loop_body
      %s28 = ssub.s32 %s23, 1
      %s29 = ssub.s32 %s23, 2
      %s36 = sadd.s32 1, %s31
      %p37 = scmp.ge.s32.totalorder %s36, 2
      %s38 = scalar_select %p37, 0, %s36
      %s39 = sadd.s32 1, %s30
      %s40 = scalar_select %p37, %s39, %s30
      %p41 = scmp.ge.s32.totalorder %s40, 2
      %s42 = scalar_select %p41, 0, %s40
      %s43 = ssub.s32 %s30, %s42
      %s44 = ssub.s32 %s31, %s38
      %s45 = sor.u32 %s43, %s44
      %p46 = scmp.eq.s32.totalorder %s45, 0
      %s48 = sadd.s32 %s47, 1
      %s49 = scalar_select %p46, %s47, %s48
      %p52 = pneg %p46
      %p53 = scmp.eq.s32.totalorder %s23, 3
      %p54 = por %p52, %p53
      %p55 = scmp.ne.s32.totalorder %s47, %s50
      %p56 = scmp.eq.s32.totalorder %s23, 0
      %p57 = por %p55, %p56
      %p58 = scmp.ne.s32.totalorder %s47, %s50
      %p59 = scmp.eq.s32.totalorder %s28, 3
      %p60 = por %p58, %p59
      %p61 = scmp.ne.s32.totalorder %s50, %s51
      %p62 = scmp.eq.s32.totalorder %s28, 0
      %p63 = por %p61, %p62
      %p64 = scmp.ne.s32.totalorder %s50, %s51
      %p65 = scmp.eq.s32.totalorder %s29, 3
      %p66 = por %p64, %p65
      %p68 = scmp.ne.s32.totalorder %s51, %s67
      %p69 = scmp.eq.s32.totalorder %s29, 0
      %p70 = por %p68, %p69
      %s72 = sadd.s32 %s71, 1
      %p75 = scmp.eq.s32.totalorder %s23, 3
      %p76 = scmp.ne.s32.totalorder %s71, %s73
      %p77 = scmp.eq.s32.totalorder %s23, 0
      %p78 = por %p76, %p77
      %p79 = scmp.ne.s32.totalorder %s71, %s73
      %p80 = scmp.eq.s32.totalorder %s28, 3
      %p81 = por %p79, %p80
      %p82 = scmp.ne.s32.totalorder %s73, %s74
      %p83 = scmp.eq.s32.totalorder %s28, 0
      %p84 = por %p82, %p83
      %p85 = scmp.ne.s32.totalorder %s73, %s74
      %p86 = scmp.eq.s32.totalorder %s29, 3
      %p87 = por %p85, %p86
      %p89 = scmp.ne.s32.totalorder %s74, %s88
      %p90 = scmp.eq.s32.totalorder %s29, 0
      %p91 = por %p89, %p90
      %s93 = sadd.s32 %s92, 1
      %p96 = scmp.eq.s32.totalorder %s23, 3
      %p97 = scmp.ne.s32.totalorder %s92, %s94
      %p98 = scmp.eq.s32.totalorder %s23, 0
      %p99 = por %p97, %p98
      %p100 = scmp.ne.s32.totalorder %s92, %s94
      %p101 = scmp.eq.s32.totalorder %s28, 3
      %p102 = por %p100, %p101
      %p103 = scmp.ne.s32.totalorder %s94, %s95
      %p104 = scmp.eq.s32.totalorder %s28, 0
      %p105 = por %p103, %p104
      %p106 = scmp.ne.s32.totalorder %s94, %s95
      %p107 = scmp.eq.s32.totalorder %s29, 3
      %p108 = por %p106, %p107
      %p110 = scmp.ne.s32.totalorder %s95, %s109
      %p111 = scmp.eq.s32.totalorder %s29, 0
      %p112 = por %p110, %p111
      %s114 = sadd.s32 %s113, 1
      %p117 = scmp.eq.s32.totalorder %s23, 3
      %p118 = scmp.ne.s32.totalorder %s113, %s115
      %p119 = scmp.eq.s32.totalorder %s23, 0
      %p120 = por %p118, %p119
      %p121 = scmp.ne.s32.totalorder %s113, %s115
      %p122 = scmp.eq.s32.totalorder %s28, 3
      %p123 = por %p121, %p122
      %p124 = scmp.ne.s32.totalorder %s115, %s116
      %p125 = scmp.eq.s32.totalorder %s28, 0
      %p126 = por %p124, %p125
      %p127 = scmp.ne.s32.totalorder %s115, %s116
      %p128 = scmp.eq.s32.totalorder %s29, 3
      %p129 = por %p127, %p128
      %p131 = scmp.ne.s32.totalorder %s116, %s130
      %p132 = scmp.eq.s32.totalorder %s29, 0
      %p133 = por %p131, %p132
      %s135 = sadd.s32 %s134, 1
      %p138 = scmp.eq.s32.totalorder %s23, 3
      %p139 = scmp.ne.s32.totalorder %s134, %s136
      %p140 = scmp.eq.s32.totalorder %s23, 0
      %p141 = por %p139, %p140
      %p142 = scmp.ne.s32.totalorder %s134, %s136
      %p143 = scmp.eq.s32.totalorder %s28, 3
      %p144 = por %p142, %p143
      %p145 = scmp.ne.s32.totalorder %s136, %s137
      %p146 = scmp.eq.s32.totalorder %s28, 0
      %p147 = por %p145, %p146
      %p148 = scmp.ne.s32.totalorder %s136, %s137
      %p149 = scmp.eq.s32.totalorder %s29, 3
      %p150 = por %p148, %p149
      %p152 = scmp.ne.s32.totalorder %s137, %s151
      %p153 = scmp.eq.s32.totalorder %s29, 0
      %p154 = por %p152, %p153
      %s156 = sadd.s32 %s155, 1
      %p159 = scmp.eq.s32.totalorder %s23, 3
      %p160 = scmp.ne.s32.totalorder %s155, %s157
      %p161 = scmp.eq.s32.totalorder %s23, 0
      %p162 = por %p160, %p161
      %p163 = scmp.ne.s32.totalorder %s155, %s157
      %p164 = scmp.eq.s32.totalorder %s28, 3
      %p165 = por %p163, %p164
      %p166 = scmp.ne.s32.totalorder %s157, %s158
      %p167 = scmp.eq.s32.totalorder %s28, 0
      %p168 = por %p166, %p167
      %p169 = scmp.ne.s32.totalorder %s157, %s158
      %p170 = scmp.eq.s32.totalorder %s29, 3
      %p171 = por %p169, %p170
      %p173 = scmp.ne.s32.totalorder %s158, %s172
      %p174 = scmp.eq.s32.totalorder %s29, 0
      %p175 = por %p173, %p174
      %s177 = sadd.s32 %s176, 1
      %p180 = scmp.eq.s32.totalorder %s23, 3
      %p181 = scmp.ne.s32.totalorder %s176, %s178
      %p182 = scmp.eq.s32.totalorder %s23, 0
      %p183 = por %p181, %p182
      %p184 = scmp.ne.s32.totalorder %s176, %s178
      %p185 = scmp.eq.s32.totalorder %s28, 3
      %p186 = por %p184, %p185
      %p187 = scmp.ne.s32.totalorder %s178, %s179
      %p188 = scmp.eq.s32.totalorder %s28, 0
      %p189 = por %p187, %p188
      %p190 = scmp.ne.s32.totalorder %s178, %s179
      %p191 = scmp.eq.s32.totalorder %s29, 3
      %p192 = por %p190, %p191
      %p194 = scmp.ne.s32.totalorder %s179, %s193
      %p195 = scmp.eq.s32.totalorder %s29, 0
      %p196 = por %p194, %p195
      %s198 = sadd.s32 %s197, 1
      %p201 = scmp.eq.s32.totalorder %s23, 3
      %p202 = scmp.ne.s32.totalorder %s197, %s199
      %p203 = scmp.eq.s32.totalorder %s23, 0
      %p204 = por %p202, %p203
      %p205 = scmp.ne.s32.totalorder %s197, %s199
      %p206 = scmp.eq.s32.totalorder %s28, 3
      %p207 = por %p205, %p206
      %p208 = scmp.ne.s32.totalorder %s199, %s200
      %p209 = scmp.eq.s32.totalorder %s28, 0
      %p210 = por %p208, %p209
      %p211 = scmp.ne.s32.totalorder %s199, %s200
      %p212 = scmp.eq.s32.totalorder %s29, 3
      %p213 = por %p211, %p212
      %p215 = scmp.ne.s32.totalorder %s200, %s214
      %p216 = scmp.eq.s32.totalorder %s29, 0
      %p217 = por %p215, %p216
      %s219 = sadd.s32 %s218, 1
      %p222 = scmp.eq.s32.totalorder %s23, 3
      %p223 = scmp.ne.s32.totalorder %s218, %s220
      %p224 = scmp.eq.s32.totalorder %s23, 0
      %p225 = por %p223, %p224
      %p226 = scmp.ne.s32.totalorder %s218, %s220
      %p227 = scmp.eq.s32.totalorder %s28, 3
      %p228 = por %p226, %p227
      %p229 = scmp.ne.s32.totalorder %s220, %s221
      %p230 = scmp.eq.s32.totalorder %s28, 0
      %p231 = por %p229, %p230
      %p232 = scmp.ne.s32.totalorder %s220, %s221
      %p233 = scmp.eq.s32.totalorder %s29, 3
      %p234 = por %p232, %p233
      %p236 = scmp.ne.s32.totalorder %s221, %s235
      %p237 = scmp.eq.s32.totalorder %s29, 0
      %p238 = por %p236, %p237
      %s240 = sadd.s32 %s239, 1
      %p243 = scmp.eq.s32.totalorder %s23, 3
      %p244 = scmp.ne.s32.totalorder %s239, %s241
      %p245 = scmp.eq.s32.totalorder %s23, 0
      %p246 = por %p244, %p245
      %p247 = scmp.ne.s32.totalorder %s239, %s241
      %p248 = scmp.eq.s32.totalorder %s28, 3
      %p249 = por %p247, %p248
      %p250 = scmp.ne.s32.totalorder %s241, %s242
      %p251 = scmp.eq.s32.totalorder %s28, 0
      %p252 = por %p250, %p251
      %p253 = scmp.ne.s32.totalorder %s241, %s242
      %p254 = scmp.eq.s32.totalorder %s29, 3
      %p255 = por %p253, %p254
      %p257 = scmp.ne.s32.totalorder %s242, %s256
      %p258 = scmp.eq.s32.totalorder %s29, 0
      %p259 = por %p257, %p258
      %s261 = sadd.s32 %s260, 1
      %p264 = scmp.eq.s32.totalorder %s23, 3
      %p265 = scmp.ne.s32.totalorder %s260, %s262
      %p266 = scmp.eq.s32.totalorder %s23, 0
      %p267 = por %p265, %p266
      %p268 = scmp.ne.s32.totalorder %s260, %s262
      %p269 = scmp.eq.s32.totalorder %s28, 3
      %p270 = por %p268, %p269
      %p271 = scmp.ne.s32.totalorder %s262, %s263
      %p272 = scmp.eq.s32.totalorder %s28, 0
      %p273 = por %p271, %p272
      %p274 = scmp.ne.s32.totalorder %s262, %s263
      %p275 = scmp.eq.s32.totalorder %s29, 3
      %p276 = por %p274, %p275
      %p278 = scmp.ne.s32.totalorder %s263, %s277
      %p279 = scmp.eq.s32.totalorder %s29, 0
      %p280 = por %p278, %p279
      %s282 = sadd.s32 %s281, 1
      %p285 = scmp.eq.s32.totalorder %s23, 3
      %p286 = scmp.ne.s32.totalorder %s281, %s283
      %p287 = scmp.eq.s32.totalorder %s23, 0
      %p288 = por %p286, %p287
      %p289 = scmp.ne.s32.totalorder %s281, %s283
      %p290 = scmp.eq.s32.totalorder %s28, 3
      %p291 = por %p289, %p290
      %p292 = scmp.ne.s32.totalorder %s283, %s284
      %p293 = scmp.eq.s32.totalorder %s28, 0
      %p294 = por %p292, %p293
      %p295 = scmp.ne.s32.totalorder %s283, %s284
      %p296 = scmp.eq.s32.totalorder %s29, 3
      %p297 = por %p295, %p296
      %p299 = scmp.ne.s32.totalorder %s284, %s298
      %p300 = scmp.eq.s32.totalorder %s29, 0
      %p301 = por %p299, %p300
      %s302 = ssub.s32 %s30, %s42
      %s303 = ssub.s32 %s31, %s38
      %s304 = sor.u32 %s302, %s303
      %p305 = scmp.eq.s32.totalorder %s304, 0
      %s307 = sadd.s32 %s306, 1
      %s308 = scalar_select %p305, %s306, %s307
      %p311 = pneg %p305
      %p312 = scmp.eq.s32.totalorder %s23, 3
      %p313 = por %p311, %p312
      %p314 = scmp.ne.s32.totalorder %s306, %s309
      %p315 = scmp.eq.s32.totalorder %s23, 0
      %p316 = por %p314, %p315
      %p317 = scmp.ne.s32.totalorder %s306, %s309
      %p318 = scmp.eq.s32.totalorder %s28, 3
      %p319 = por %p317, %p318
      %p320 = scmp.ne.s32.totalorder %s309, %s310
      %p321 = scmp.eq.s32.totalorder %s28, 0
      %p322 = por %p320, %p321
      %p323 = scmp.ne.s32.totalorder %s309, %s310
      %p324 = scmp.eq.s32.totalorder %s29, 3
      %p325 = por %p323, %p324
      %p327 = scmp.ne.s32.totalorder %s310, %s326
      %p328 = scmp.eq.s32.totalorder %s29, 0
      %p329 = por %p327, %p328
      %p330 = scmp.le.s32.totalorder 1, %s23
      %p331 = scmp.lt.s32.totalorder %s23, 5
      %p332 = pnand %p330, %p331
      %p333 = pneg %p332
      // Predicated region
      $region9: #{tpu_custom_call.1} parent=5 // pred_check
        _
      $region10: #{tpu_custom_call.1} parent=5 // pred_check_branch
        %335 = sbr.rel (%p332) target = $region12
      $region11: #{tpu_custom_call.1} parent=5 // pred_region
        %s336 = ssub.s32 %s23, 1
        // Predicated region
        $region13: #{tpu_custom_call.1} parent=11 // pred_check
          %p337 = pneg %p84
        $region14: #{tpu_custom_call.1} parent=11 // pred_check_branch
          %339 = sbr.rel (%p337) target = $region16
        $region15: #{tpu_custom_call.1} parent=11 // pred_region
          %341 = vsyncadd [#allocation10], 0
          %s343 = sshll.u32 %s1, 4
          %s344 = int_to_ptr.hbm [resolvable:$true] %s343
          %s345 = sshll.u32 [#allocation9], 4
          %s346 = int_to_ptr.vmem [resolvable:$true] %s345
          %348 = dma.hbm_to_vmem [thread:$0]  %s344, 16, %s346, [#allocation10]
        $region16: #{tpu_custom_call.1} parent=11 // pred_fallthru
          _
        // Predicated region
        $region17: #{tpu_custom_call.1} parent=11 // pred_check
          %p349 = pneg %p105
        $region18: #{tpu_custom_call.1} parent=11 // pred_check_branch
          %351 = sbr.rel (%p349) target = $region20
        $region19: #{tpu_custom_call.1} parent=11 // pred_region
          _
        $region20: #{tpu_custom_call.1} parent=11 // pred_fallthru
          _
        // Predicated region
        $region21: #{tpu_custom_call.1} parent=11 // pred_check
          %p352 = pneg %p126
        $region22: #{tpu_custom_call.1} parent=11 // pred_check_branch
          %354 = sbr.rel (%p352) target = $region24
        $region23: #{tpu_custom_call.1} parent=11 // pred_region
          %356 = vsyncadd [#allocation13], 0
          %s357 = sshll.u32 %s3, 4
          %s358 = int_to_ptr.hbm [resolvable:$true] %s357
          %s359 = sshll.u32 [#allocation12], 4
          %s360 = int_to_ptr.vmem [resolvable:$true] %s359
          %365 = dma.hbm_to_vmem [thread:$0]  %s358, 256, %s360, [#allocation13], 64, 64, 4
        $region24: #{tpu_custom_call.1} parent=11 // pred_fallthru
          _
        // Predicated region
        $region25: #{tpu_custom_call.1} parent=11 // pred_check
          %p366 = pneg %p147
        $region26: #{tpu_custom_call.1} parent=11 // pred_check_branch
          %368 = sbr.rel (%p366) target = $region28
        $region27: #{tpu_custom_call.1} parent=11 // pred_region
          _
        $region28: #{tpu_custom_call.1} parent=11 // pred_fallthru
          _
        // Predicated region
        $region29: #{tpu_custom_call.1} parent=11 // pred_check
          %p369 = pneg %p168
        $region30: #{tpu_custom_call.1} parent=11 // pred_check_branch
          %371 = sbr.rel (%p369) target = $region32
        $region31: #{tpu_custom_call.1} parent=11 // pred_region
          _
        $region32: #{tpu_custom_call.1} parent=11 // pred_fallthru
          _
        // Predicated region
        $region33: #{tpu_custom_call.1} parent=11 // pred_check
          %p372 = pneg %p189
        $region34: #{tpu_custom_call.1} parent=11 // pred_check_branch
          %374 = sbr.rel (%p372) target = $region36
        $region35: #{tpu_custom_call.1} parent=11 // pred_region
          _
        $region36: #{tpu_custom_call.1} parent=11 // pred_fallthru
          _
        // Predicated region
        $region37: #{tpu_custom_call.1} parent=11 // pred_check
          %p375 = pneg %p210
        $region38: #{tpu_custom_call.1} parent=11 // pred_check_branch
          %377 = sbr.rel (%p375) target = $region40
        $region39: #{tpu_custom_call.1} parent=11 // pred_region
          _
        $region40: #{tpu_custom_call.1} parent=11 // pred_fallthru
          _
        // Predicated region
        $region41: #{tpu_custom_call.1} parent=11 // pred_check
          %p378 = pneg %p231
        $region42: #{tpu_custom_call.1} parent=11 // pred_check_branch
          %380 = sbr.rel (%p378) target = $region44
        $region43: #{tpu_custom_call.1} parent=11 // pred_region
          _
        $region44: #{tpu_custom_call.1} parent=11 // pred_fallthru
          _
        // Predicated region
        $region45: #{tpu_custom_call.1} parent=11 // pred_check
          %p381 = pneg %p252
        $region46: #{tpu_custom_call.1} parent=11 // pred_check_branch
          %383 = sbr.rel (%p381) target = $region48
        $region47: #{tpu_custom_call.1} parent=11 // pred_region
          %385 = vsyncadd [#allocation13], 0
          %s386 = sshll.u32 %s9, 4
          %s387 = int_to_ptr.hbm [resolvable:$true] %s386
          %s388 = sshll.u32 [#allocation14], 4
          %s389 = int_to_ptr.vmem [resolvable:$true] %s388
          %394 = dma.hbm_to_vmem [thread:$0]  %s387, 256, %s389, [#allocation13], 128, 128, 8
        $region48: #{tpu_custom_call.1} parent=11 // pred_fallthru
          _
        // Predicated region
        $region49: #{tpu_custom_call.1} parent=11 // pred_check
          %p395 = pneg %p273
        $region50: #{tpu_custom_call.1} parent=11 // pred_check_branch
          %397 = sbr.rel (%p395) target = $region52
        $region51: #{tpu_custom_call.1} parent=11 // pred_region
          _
        $region52: #{tpu_custom_call.1} parent=11 // pred_fallthru
          _
        // Predicated region
        $region53: #{tpu_custom_call.1} parent=11 // pred_check
          %p398 = pneg %p294
        $region54: #{tpu_custom_call.1} parent=11 // pred_check_branch
          %400 = sbr.rel (%p398) target = $region56
        $region55: #{tpu_custom_call.1} parent=11 // pred_region
          _
        $region56: #{tpu_custom_call.1} parent=11 // pred_fallthru
          _
      $region12: #{tpu_custom_call.1} parent=5 // pred_fallthru
        _
      %p401 = scmp.lt.s32.totalorder %s23, 4
      // Predicated region
      $region57: #{tpu_custom_call.1} parent=5 // pred_check
        %p402 = pneg %p401
      $region58: #{tpu_custom_call.1} parent=5 // pred_check_branch
        %404 = sbr.rel (%p402) target = $region60
      $region59: #{tpu_custom_call.1} parent=5 // pred_region
        // Predicated region
        $region61: #{tpu_custom_call.1} parent=59 // pred_check
          %p405 = pneg %p57
        $region62: #{tpu_custom_call.1} parent=59 // pred_check_branch
          %407 = sbr.rel (%p405) target = $region64
        $region63: #{tpu_custom_call.1} parent=59 // pred_region
          %s408 = smul.u32 2, %s31
          %p409 = scmp.lt.s32.totalorder %s30, 1
          %s410 = scalar_select %p409, %s30, 1
          %p411 = scmp.lt.s32.totalorder %s408, 3
          %s412 = scalar_select %p411, %s408, 3
          %s413 = smul.addr %s410, 4
          %s414 = sadd.s32 %s412, %s413
          %s415 = smul.addr %s414, 8
          %s416 = scalar_lea.vmem %s0, %s415
          %s417 = smul.u32 2, %s31
        $region64: #{tpu_custom_call.1} parent=59 // pred_fallthru
          _
      $region60: #{tpu_custom_call.1} parent=5 // pred_fallthru
        _
      %p418 = scmp.le.s32.totalorder 1, %s23
      %p419 = scmp.lt.s32.totalorder %s23, 5
      %p420 = pnand %p418, %p419
      %p421 = pneg %p420
      // Predicated region
      $region65: #{tpu_custom_call.1} parent=5 // pred_check
        _
      $region66: #{tpu_custom_call.1} parent=5 // pred_check_branch
        %423 = sbr.rel (%p420) target = $region68
      $region67: #{tpu_custom_call.1} parent=5 // pred_region
        %s424 = ssub.s32 %s23, 1
        // Predicated region
        $region69: #{tpu_custom_call.1} parent=67 // pred_check
          %p425 = pneg %p84
        $region70: #{tpu_custom_call.1} parent=67 // pred_check_branch
          %427 = sbr.rel (%p425) target = $region72
        $region71: #{tpu_custom_call.1} parent=67 // pred_region
          %429 = dma.done [#allocation10], 16
        $region72: #{tpu_custom_call.1} parent=67 // pred_fallthru
          _
        // Predicated region
        $region73: #{tpu_custom_call.1} parent=67 // pred_check
          %p430 = pneg %p126
        $region74: #{tpu_custom_call.1} parent=67 // pred_check_branch
          %432 = sbr.rel (%p430) target = $region76
        $region75: #{tpu_custom_call.1} parent=67 // pred_region
          %434 = dma.done [#allocation13], 256
        $region76: #{tpu_custom_call.1} parent=67 // pred_fallthru
          _
        // Predicated region
        $region77: #{tpu_custom_call.1} parent=67 // pred_check
          %p435 = pneg %p252
        $region78: #{tpu_custom_call.1} parent=67 // pred_check_branch
          %437 = sbr.rel (%p435) target = $region80
        $region79: #{tpu_custom_call.1} parent=67 // pred_region
          %439 = dma.done [#allocation13], 256
        $region80: #{tpu_custom_call.1} parent=67 // pred_fallthru
          _
        %s440 = smul.u32 2, %s33
        %p441 = scmp.lt.s32.totalorder %s32, 1
        %s442 = scalar_select %p441, %s32, 1
        %p443 = scmp.lt.s32.totalorder %s440, 3
        %s444 = scalar_select %p443, %s440, 3
        %s445 = smul.addr %s442, 4
        %s446 = sadd.s32 %s444, %s445
        %s447 = smul.addr %s446, 8
        %s448 = scalar_lea.vmem %s0, %s447
        %p449 = pneg %p63
        %p450 = pneg %p60
        %p451 = pneg %p84
        %p452 = pneg %p81
        %p453 = pneg %p105
        %p454 = pneg %p102
        %p455 = pneg %p126
        %p456 = pneg %p123
        %p457 = pneg %p147
        %p458 = pneg %p144
        %p459 = pneg %p168
        %p460 = pneg %p165
        %p461 = pneg %p189
        %p462 = pneg %p186
        %p463 = pneg %p210
        %p464 = pneg %p207
        %p465 = pneg %p231
        %p466 = pneg %p228
        %p467 = pneg %p252
        %p468 = pneg %p249
        %p469 = pneg %p273
        %p470 = pneg %p270
        %p471 = pneg %p294
        %p472 = pneg %p291
        %p473 = pneg %p322
        %p474 = pneg %p319
        %s475 = sand.u32 %s309, 1
        %s476 = scalar_lea.sflag [#allocation11], %s475
        %s477 = sand.u32 %s309, 1
        %s478 = smul.addr %s477, 16
        %s479 = scalar_lea.vmem [#allocation15], %s478
        %s480 = smul.u32 2, %s33
        %p481 = scmp.lt.s32.totalorder %s32, 1
        %s482 = scalar_select %p481, %s32, 1
        %p483 = scmp.lt.s32.totalorder %s480, 3
        %s484 = scalar_select %p483, %s480, 3
        %s485 = smul.addr %s482, 4
        %s486 = sadd.s32 %s484, %s485
        %s487 = smul.addr %s486, 8
        %s488 = scalar_lea.vmem %s0, %s487
        %s489 = smul.u32 2, %s33
        %s490 = smul.u32 2, %s33
        %p492 = scmp.eq.s32.totalorder %s33, 0
        // Predicated region
        $region81: #{tpu_custom_call.1} parent=67 // pred_check
          %p493 = pneg %p492
        $region82: #{tpu_custom_call.1} parent=67 // pred_check_branch
          %495 = sbr.rel (%p493) target = $region84
        $region83: #{tpu_custom_call.1} parent=67 // pred_region
          %vm496 = vcmask 523264
          %497 = vst.msk [vmem:[#allocation2] sm:$0xff] %vm496, 0.0
          %498 = vst.msk [vmem:[#allocation2 + $0x8] sm:$0xff] %vm496, 0.0
          %499 = vst.msk [vmem:[#allocation3] sm:$0xff] %vm496, 0.0
          %500 = vst.msk [vmem:[#allocation3 + $0x8] sm:$0xff] %vm496, 0.0
          %501 = vst.msk [vmem:[#allocation3 + $0x10] sm:$0xff] %vm496, 0.0
        $region84: #{tpu_custom_call.1} parent=67 // pred_fallthru
          _
        %v502 = vld [vmem:[%s488] sm:$0xff]
        %v503 = vld [vmem:[%s488 + $0x8] sm:$0xff]
        %v504 = vmul.f32 %v502, %v502
        %v505 = vmul.f32 %v503, %v503
        %vm506 = vcmask 261120
        %v507 = vsel %vm506, %v504, 0.0
        %508 = vadd.xlane.f32.xlu0 %v507
        %v509 = vpop.xlane.xlu0 %508
        %v510 = vsel %vm506, %v505, 0.0
        %511 = vadd.xlane.f32.xlu0 %v510
        %v512 = vpop.xlane.xlu0 %511
        %v513 = vrcp.pop 32.0
        %v514 = vmul.f32 32.0, %v513
        %v515 = vsub.f32 1.0, %v514
        %v516 = vmul.f32 %v513, %v515
        %v517 = vadd.f32 %v513, %v516
        %vm518 = vweird.f32 %v513
        %v519 = vsel %vm518, %v513, %v517
        %v520 = vmul.f32 %v509, %v519
        %v521 = vmul.f32 %v512, %v519
        %v522 = vadd.f32 %v520, 1e-05
        %v523 = vadd.f32 %v521, 1e-05
        %v524 = vrsqrt.pop %v522
        %v525 = vmul.f32 %v524, %v522
        %v526 = vmul.f32 %v525, %v524
        %v527 = vmul.f32 0.5, %v526
        %v528 = vsub.f32 1.5, %v527
        %v529 = vmul.f32 %v524, %v528
        %vm530 = vweird.f32 %v522
        %vm531 = vweird.f32 %v524
        %vm532 = vmor %vm530, %vm531
        %v533 = vsel %vm532, %v524, %v529
        %v534 = vrsqrt.pop %v523
        %v535 = vmul.f32 %v534, %v523
        %v536 = vmul.f32 %v535, %v534
        %v537 = vmul.f32 0.5, %v536
        %v538 = vsub.f32 1.5, %v537
        %v539 = vmul.f32 %v534, %v538
        %vm540 = vweird.f32 %v523
        %vm541 = vweird.f32 %v534
        %vm542 = vmor %vm540, %vm541
        %v543 = vsel %vm542, %v534, %v539
        %v544 = vmul.f32 %v502, %v533
        %v545 = vmul.f32 %v503, %v543
        %v546 = vld [vmem:[#allocation9] sm:$0x1]
        %v548 = vperm.slane %v546, 0
        %v550 = vmul.f32 %v544, %v548
        %v551 = vmul.f32 %v545, %v548
        %v552 = vpack.c.bf16 %v551, %v550
        %v553 = vld [vmem:[%s2] sm:$0xf]
        %v554 = vld [vmem:[%s2 + $0x4] sm:$0xf]
        %v555 = vld [vmem:[%s2 + $0x8] sm:$0xf]
        %v556 = vld [vmem:[%s2 + $0xc] sm:$0xf]
        %v561 = vunpack.c.l.b16 %v553
        %v562 = vunpack.c.l.b16 %v554
        %v563 = vunpack.c.l.b16 %v555
        %v564 = vunpack.c.l.b16 %v556
        %v565 = vpack.c.b16 %v562, %v561
        %v566 = vpack.c.b16 %v564, %v563
        %v570 = vsel %vm506, %v552, 0
        %572 = vmatpush.bf16.msra.mxu0 0
        %573 = vmatpush.bf16.msra.mxu0 0
        %574 = vmatpush.bf16.msra.mxu0 0
        %575 = vmatpush.bf16.msra.mxu0 0
        %576 = vmatpush.bf16.msra.mxu0 0
        %577 = vmatpush.bf16.msra.mxu0 0
        %578 = vmatpush.bf16.msra.mxu0 %v566
        %579 = vmatpush.bf16.msra.mxu0 %v565
        %580 = vmatmul.bf16.gmra.mxu0 %v570
        %v581 = vpop.f32.mrf.mxu0
        %v582 = vadd.f32 0.0, %v581
        %v583 = vpop.f32.mrf.mxu0
        %v584 = vadd.f32 0.0, %v583
        %585 = vdwg.mxu0
        %v586 = vld [vmem:[#allocation12] sm:$0xf]
        %v587 = vld [vmem:[#allocation12 + $0x4] sm:$0xf]
        %v588 = vld [vmem:[#allocation12 + $0x8] sm:$0xf]
        %v589 = vld [vmem:[#allocation12 + $0xc] sm:$0xf]
        %v594 = vunpack.c.l.b16 %v586
        %v595 = vunpack.c.l.b16 %v587
        %v596 = vunpack.c.l.b16 %v588
        %v597 = vunpack.c.l.b16 %v589
        %v598 = vpack.c.b16 %v595, %v594
        %v599 = vpack.c.b16 %v597, %v596
        %602 = vmatpush.bf16.msra.mxu0 0
        %603 = vmatpush.bf16.msra.mxu0 0
        %604 = vmatpush.bf16.msra.mxu0 0
        %605 = vmatpush.bf16.msra.mxu0 0
        %606 = vmatpush.bf16.msra.mxu0 0
        %607 = vmatpush.bf16.msra.mxu0 0
        %608 = vmatpush.bf16.msra.mxu0 %v599
        %609 = vmatpush.bf16.msra.mxu0 %v598
        %610 = vmatmul.bf16.gmra.mxu0 %v570
        %v611 = vpop.f32.mrf.mxu0
        %v612 = vadd.f32 0.0, %v611
        %v613 = vpop.f32.mrf.mxu0
        %v614 = vadd.f32 0.0, %v613
        %615 = vdwg.mxu0
        %vm616 = vcmask 523264
        %617 = vst.msk [vmem:[#allocation3 + $0x8] sm:$0xff] %vm616, %v582
        %618 = vst.msk [vmem:[#allocation3 + $0x10] sm:$0xff] %vm616, %v584
        %v619 = vld [vmem:[%s5] sm:$0x1]
        %v620 = vld [vmem:[#allocation3 + $0x5] sm:$0xff]
        %v621 = vld [vmem:[#allocation3 + $0xd] sm:$0xff]
        %v622 = vld [vmem:[%s4] sm:$0x1]
        %v623 = vperm.slane %v622, 0
        %v624 = vmul.f32 %v620, %v623
        %v625 = vmul.f32 %v621, %v623
        %v627 = vperm.slane %v619, 0
        %v629 = vadd.f32 %v627, %v624
        %v630 = vadd.f32 %v627, %v625
        %v631 = vld [vmem:[#allocation3 + $0x6] sm:$0xff]
        %v632 = vld [vmem:[#allocation3 + $0xe] sm:$0xff]
        %v633 = vld [vmem:[%s4 + $0x1] sm:$0x1]
        %v634 = vperm.slane %v633, 0
        %v635 = vmul.f32 %v631, %v634
        %v636 = vmul.f32 %v632, %v634
        %v637 = vadd.f32 %v629, %v635
        %v638 = vadd.f32 %v630, %v636
        %v639 = vld [vmem:[#allocation3 + $0x7] sm:$0xff]
        %v640 = vld [vmem:[#allocation3 + $0xf] sm:$0xff]
        %v641 = vld [vmem:[%s4 + $0x2] sm:$0x1]
        %v642 = vperm.slane %v641, 0
        %v643 = vmul.f32 %v639, %v642
        %v644 = vmul.f32 %v640, %v642
        %v645 = vadd.f32 %v637, %v643
        %v646 = vadd.f32 %v638, %v644
        %v647 = vld [vmem:[#allocation3 + $0x8] sm:$0xff]
        %v648 = vld [vmem:[#allocation3 + $0x10] sm:$0xff]
        %v649 = vld [vmem:[%s4 + $0x3] sm:$0x1]
        %v650 = vperm.slane %v649, 0
        %v651 = vmul.f32 %v647, %v650
        %v652 = vmul.f32 %v648, %v650
        %v653 = vadd.f32 %v645, %v651
        %v654 = vadd.f32 %v646, %v652
        %v655 = vld [vmem:[#allocation3 + $0x15] sm:$0x7]
        %vm656 = vcmask 518144
        %657 = vst.msk [vmem:[#allocation3 + $0x5] sm:$0x7] %vm656, %v655
        %v658 = vsub.f32 0.0, %v653
        %v659 = vsub.f32 0.0, %v654
        %v660 = vmul.f32 %v658, 1.442695
        %v661 = vpow.pop %v660
        %v662 = vmul.f32 %v659, 1.442695
        %v663 = vpow.pop %v662
        %v664 = vadd.f32 %v661, 1.0
        %v665 = vadd.f32 %v663, 1.0
        %v666 = vrcp.pop %v664
        %v667 = vmul.f32 %v664, %v666
        %v668 = vsub.f32 1.0, %v667
        %v669 = vmul.f32 %v666, %v668
        %v670 = vadd.f32 %v666, %v669
        %vm671 = vweird.f32 %v664
        %vm672 = vweird.f32 %v666
        %vm673 = vmor %vm671, %vm672
        %v674 = vsel %vm673, %v666, %v670
        %v675 = vand.u32 2147483647, %v664
        %vm676 = vcmp.eq.f32.partialorder %v675, 8.507059e+37
        %v677 = vand.u32 %v664, 2147483648
        %v678 = vor.u32 1.1754944e-38, %v677
        %v679 = vsel %vm676, %v678, %v674
        %v680 = vmul.f32 1.0, %v679
        %v681 = vrcp.pop %v665
        %v682 = vmul.f32 %v665, %v681
        %v683 = vsub.f32 1.0, %v682
        %v684 = vmul.f32 %v681, %v683
        %v685 = vadd.f32 %v681, %v684
        %vm686 = vweird.f32 %v665
        %vm687 = vweird.f32 %v681
        %vm688 = vmor %vm686, %vm687
        %v689 = vsel %vm688, %v681, %v685
        %v690 = vand.u32 2147483647, %v665
        %vm691 = vcmp.eq.f32.partialorder %v690, 8.507059e+37
        %v692 = vand.u32 %v665, 2147483648
        %v693 = vor.u32 1.1754944e-38, %v692
        %v694 = vsel %vm691, %v693, %v689
        %v695 = vmul.f32 1.0, %v694
        %v696 = vmul.f32 %v653, %v680
        %v697 = vmul.f32 %v654, %v695
        %v698 = vpack.c.bf16 %v697, %v696
        %v699 = vld [vmem:[%s6] sm:$0xf]
        %v700 = vld [vmem:[%s6 + $0x4] sm:$0xf]
        %v701 = vld [vmem:[%s6 + $0x8] sm:$0xf]
        %v702 = vld [vmem:[%s6 + $0xc] sm:$0xf]
        %v703 = vld [vmem:[%s6 + $0x10] sm:$0xf]
        %v704 = vld [vmem:[%s6 + $0x14] sm:$0xf]
        %v705 = vld [vmem:[%s6 + $0x18] sm:$0xf]
        %v706 = vld [vmem:[%s6 + $0x1c] sm:$0xf]
        %v715 = vunpack.c.l.b16 %v699
        %v716 = vunpack.c.l.b16 %v700
        %v717 = vunpack.c.l.b16 %v701
        %v718 = vunpack.c.l.b16 %v702
        %v719 = vunpack.c.l.b16 %v703
        %v720 = vunpack.c.l.b16 %v704
        %v721 = vunpack.c.l.b16 %v705
        %v722 = vunpack.c.l.b16 %v706
        %v723 = vpack.c.b16 %v716, %v715
        %v724 = vpack.c.b16 %v718, %v717
        %v725 = vpack.c.b16 %v720, %v719
        %v726 = vpack.c.b16 %v722, %v721
        %v732 = vsel %vm616, %v698, 0
        %734 = vmatpush.bf16.msra.mxu0 0
        %735 = vmatpush.bf16.msra.mxu0 0
        %736 = vmatpush.bf16.msra.mxu0 0
        %737 = vmatpush.bf16.msra.mxu0 0
        %738 = vmatpush.bf16.msra.mxu0 %v726
        %739 = vmatpush.bf16.msra.mxu0 %v725
        %740 = vmatpush.bf16.msra.mxu0 %v724
        %741 = vmatpush.bf16.msra.mxu0 %v723
        %742 = vmatmul.bf16.gmra.mxu0 %v732
        %v743 = vpop.f32.mrf.mxu0
        %v744 = vadd.f32 0.0, %v743
        %v745 = vpop.f32.mrf.mxu0
        %v746 = vadd.f32 0.0, %v745
        %747 = vdwg.mxu0
        %v748 = vpack.c.bf16 %v746, %v744
        %v749 = vld [vmem:[%s7] sm:$0x1]
        %v750 = vld [vmem:[%s8] sm:$0x1]
        %v752 = vperm.slane %v750, 0
        %vm754 = vcmask 15360
        %v756 = vsel %vm754, %v748, 0
        %vm758 = vcmask 1040384
        %v760 = vsel %vm758, %v749, 0
        %762 = vmatpush.bf16.msra.mxu0 0
        %763 = vmatpush.bf16.msra.mxu0 0
        %764 = vmatpush.bf16.msra.mxu0 0
        %765 = vmatpush.bf16.msra.mxu0 0
        %766 = vmatpush.bf16.msra.mxu0 0
        %767 = vmatpush.bf16.msra.mxu0 0
        %768 = vmatpush.bf16.msra.mxu0 0
        %769 = vmatpush.bf16.msra.mxu0 %v760
        %770 = vmatmul.bf16.gmra.mxu0 %v756
        %v771 = vpop.f32.mrf.mxu0
        %v772 = vadd.f32 %v752, %v771
        %v773 = vpop.f32.mrf.mxu0
        %v774 = vadd.f32 %v752, %v773
        %775 = vdwg.mxu0
        %vm776 = vcmp.gt.f32.partialorder %v772, 20.0
        %vm777 = vcmp.gt.f32.partialorder %v774, 20.0
        %v778 = vmin.f32 %v772, 20.0
        %v779 = vmin.f32 %v774, 20.0
        %v780 = vmul.f32 %v778, 1.442695
        %v781 = vpow.pop %v780
        %v782 = vmul.f32 %v779, 1.442695
        %v783 = vpow.pop %v782
        %v784 = vadd.f32 %v781, 1.0
        %v785 = vadd.f32 %v783, 1.0
        %v786 = vlog2.pop %v784
        %v787 = vmul.f32 %v786, 0.6931472
        %v788 = vlog2.pop %v785
        %v789 = vmul.f32 %v788, 0.6931472
        %v790 = vsel %vm776, %v772, %v787
        %v791 = vsel %vm777, %v774, %v789
        %792 = vst.msk [vmem:[#allocation5] sm:$0xff] %vm616, %v790
        %793 = vst.msk [vmem:[#allocation5 + $0x8] sm:$0xff] %vm616, %v791
        %v794 = vmul.f32 %v790, %v696
        %v795 = vmul.f32 %v791, %v697
        %796 = vst.msk [vmem:[#allocation6] sm:$0xff] %vm616, %v794
        %797 = vst.msk [vmem:[#allocation6 + $0x8] sm:$0xff] %vm616, %v795
        %800 = vrot.lane.b32.xlu0 %v744, 126
        %v801 = vpop.permute.xlu0 %800
        %802 = vrot.lane.b32.xlu0 %v746, 126
        %v803 = vpop.permute.xlu0 %802
        %vm806 = vcmask 130048
        %807 = vst.msk [vmem:[#allocation7] sm:$0xff] %vm806, %v801
        %808 = vst.msk [vmem:[#allocation7 + $0x8] sm:$0xff] %vm806, %v803
        %809 = vrot.lane.b32.xlu0 %v744, 110
        %v810 = vpop.permute.xlu0 %809
        %811 = vrot.lane.b32.xlu0 %v746, 110
        %v812 = vpop.permute.xlu0 %811
        %815 = vst.msk [vmem:[#allocation8] sm:$0xff] %vm806, %v810
        %816 = vst.msk [vmem:[#allocation8 + $0x8] sm:$0xff] %vm806, %v812
        %v817 = vld [vmem:[#allocation14] sm:$0xff]
        %v818 = vld [vmem:[#allocation14 + $0x8] sm:$0xff]
        %v819 = vld [vmem:[#allocation2] sm:$0xff]
        %v820 = vld [vmem:[#allocation2 + $0x8] sm:$0xff]
        %v821 = vld [vmem:[#allocation5] sm:$0xff]
        %v822 = vld [vmem:[#allocation6] sm:$0xff]
        %v823 = vld [vmem:[#allocation7] sm:$0xff]
        %824 = vxpose.xlu0.b32.start [1/16] %v823, 128
        %825 = vxpose.xlu0.b32.cont [2/16] 0.0, 128
        %826 = vxpose.xlu0.b32.cont [3/16] 0.0, 128
        %827 = vxpose.xlu0.b32.cont [4/16] 0.0, 128
        %828 = vxpose.xlu0.b32.cont [5/16] 0.0, 128
        %829 = vxpose.xlu0.b32.cont [6/16] 0.0, 128
        %830 = vxpose.xlu0.b32.cont [7/16] 0.0, 128
        %831 = vxpose.xlu0.b32.cont [8/16] 0.0, 128
        %832 = vxpose.xlu0.b32.cont [9/16] 0.0, 128
        %833 = vxpose.xlu0.b32.cont [10/16] 0.0, 128
        %834 = vxpose.xlu0.b32.cont [11/16] 0.0, 128
        %835 = vxpose.xlu0.b32.cont [12/16] 0.0, 128
        %836 = vxpose.xlu0.b32.cont [13/16] 0.0, 128
        %837 = vxpose.xlu0.b32.cont [14/16] 0.0, 128
        %838 = vxpose.xlu0.b32.cont [15/16] 0.0, 128
        %839 = vxpose.xlu0.b32.end [16/16] 0.0, 128
        %v840 = vpop.trf.xlu0
        %v841 = vpop.trf.xlu0
        %v842 = vpop.trf.xlu0
        %v843 = vpop.trf.xlu0
        %v844 = vpop.trf.xlu0
        %v845 = vpop.trf.xlu0
        %v846 = vpop.trf.xlu0
        %v847 = vpop.trf.xlu0
        %v848 = vpop.trf.xlu0
        %v849 = vpop.trf.xlu0
        %v850 = vpop.trf.xlu0
        %v851 = vpop.trf.xlu0
        %v852 = vpop.trf.xlu0
        %v853 = vpop.trf.xlu0
        %v854 = vpop.trf.xlu0
        %v855 = vpop.trf.xlu0
        %v856 = vld [vmem:[#allocation8] sm:$0xff]
        %857 = vxpose.xlu0.b32.start [1/16] %v856, 128
        %858 = vxpose.xlu0.b32.cont [2/16] 0.0, 128
        %859 = vxpose.xlu0.b32.cont [3/16] 0.0, 128
        %860 = vxpose.xlu0.b32.cont [4/16] 0.0, 128
        %861 = vxpose.xlu0.b32.cont [5/16] 0.0, 128
        %862 = vxpose.xlu0.b32.cont [6/16] 0.0, 128
        %863 = vxpose.xlu0.b32.cont [7/16] 0.0, 128
        %864 = vxpose.xlu0.b32.cont [8/16] 0.0, 128
        %865 = vxpose.xlu0.b32.cont [9/16] 0.0, 128
        %866 = vxpose.xlu0.b32.cont [10/16] 0.0, 128
        %867 = vxpose.xlu0.b32.cont [11/16] 0.0, 128
        %868 = vxpose.xlu0.b32.cont [12/16] 0.0, 128
        %869 = vxpose.xlu0.b32.cont [13/16] 0.0, 128
        %870 = vxpose.xlu0.b32.cont [14/16] 0.0, 128
        %871 = vxpose.xlu0.b32.cont [15/16] 0.0, 128
        %872 = vxpose.xlu0.b32.end [16/16] 0.0, 128
        %v873 = vpop.trf.xlu0
        %v874 = vpop.trf.xlu0
        %v875 = vpop.trf.xlu0
        %v876 = vpop.trf.xlu0
        %v877 = vpop.trf.xlu0
        %v878 = vpop.trf.xlu0
        %v879 = vpop.trf.xlu0
        %v880 = vpop.trf.xlu0
        %v881 = vpop.trf.xlu0
        %v882 = vpop.trf.xlu0
        %v883 = vpop.trf.xlu0
        %v884 = vpop.trf.xlu0
        %v885 = vpop.trf.xlu0
        %v886 = vpop.trf.xlu0
        %v887 = vpop.trf.xlu0
        %v888 = vpop.trf.xlu0
        %v889 = vperm.slane %v821, 0
        %v890 = vmul.f32 %v817, %v889
        %v891 = vmul.f32 %v818, %v889
        %v892 = vmul.f32 %v890, 1.442695
        %v893 = vpow.pop %v892
        %v894 = vmul.f32 %v891, 1.442695
        %v895 = vpow.pop %v894
        %v896 = vperm.slane %v821, 1
        %v897 = vmul.f32 %v817, %v896
        %v898 = vmul.f32 %v818, %v896
        %v899 = vmul.f32 %v897, 1.442695
        %v900 = vpow.pop %v899
        %v901 = vmul.f32 %v898, 1.442695
        %v902 = vpow.pop %v901
        %v903 = vperm.slane %v821, 2
        %v904 = vmul.f32 %v817, %v903
        %v905 = vmul.f32 %v818, %v903
        %v906 = vmul.f32 %v904, 1.442695
        %v907 = vpow.pop %v906
        %v908 = vmul.f32 %v905, 1.442695
        %v909 = vpow.pop %v908
        %v910 = vperm.slane %v821, 3
        %v911 = vmul.f32 %v817, %v910
        %v912 = vmul.f32 %v818, %v910
        %v913 = vmul.f32 %v911, 1.442695
        %v914 = vpow.pop %v913
        %v915 = vmul.f32 %v912, 1.442695
        %v916 = vpow.pop %v915
        %v917 = vperm.slane %v821, 4
        %v918 = vmul.f32 %v817, %v917
        %v919 = vmul.f32 %v818, %v917
        %v920 = vmul.f32 %v918, 1.442695
        %v921 = vpow.pop %v920
        %v922 = vmul.f32 %v919, 1.442695
        %v923 = vpow.pop %v922
        %v924 = vperm.slane %v821, 5
        %v925 = vmul.f32 %v817, %v924
        %v926 = vmul.f32 %v818, %v924
        %v927 = vmul.f32 %v925, 1.442695
        %v928 = vpow.pop %v927
        %v929 = vmul.f32 %v926, 1.442695
        %v930 = vpow.pop %v929
        %v931 = vperm.slane %v821, 6
        %v932 = vmul.f32 %v817, %v931
        %v933 = vmul.f32 %v818, %v931
        %v934 = vmul.f32 %v932, 1.442695
        %v935 = vpow.pop %v934
        %v936 = vmul.f32 %v933, 1.442695
        %v937 = vpow.pop %v936
        %v938 = vperm.slane %v821, 7
        %v939 = vmul.f32 %v817, %v938
        %v940 = vmul.f32 %v818, %v938
        %v941 = vmul.f32 %v939, 1.442695
        %v942 = vpow.pop %v941
        %v943 = vmul.f32 %v940, 1.442695
        %v944 = vpow.pop %v943
        %946 = vset.pattern.permute.xlu0 0
        %947 = vperm.xlu0 %946, %v840
        %v948 = vpop.permute.xlu0 %947
        %951 = vset.pattern.permute.xlu0 0
        %952 = vperm.xlu0 %951, %v841
        %v953 = vpop.permute.xlu0 %952
        %v955 = vperm.slane %v822, 0
        %v956 = vmul.f32 %v948, %v955
        %v957 = vmul.f32 %v953, %v955
        %958 = vset.pattern.permute.xlu0 1
        %959 = vperm.xlu0 %958, %v840
        %v960 = vpop.permute.xlu0 %959
        %962 = vset.pattern.permute.xlu0 1
        %963 = vperm.xlu0 %962, %v841
        %v964 = vpop.permute.xlu0 %963
        %v966 = vperm.slane %v822, 1
        %v967 = vmul.f32 %v960, %v966
        %v968 = vmul.f32 %v964, %v966
        %969 = vset.pattern.permute.xlu0 2
        %970 = vperm.xlu0 %969, %v840
        %v971 = vpop.permute.xlu0 %970
        %973 = vset.pattern.permute.xlu0 2
        %974 = vperm.xlu0 %973, %v841
        %v975 = vpop.permute.xlu0 %974
        %v977 = vperm.slane %v822, 2
        %v978 = vmul.f32 %v971, %v977
        %v979 = vmul.f32 %v975, %v977
        %980 = vset.pattern.permute.xlu0 3
        %981 = vperm.xlu0 %980, %v840
        %v982 = vpop.permute.xlu0 %981
        %984 = vset.pattern.permute.xlu0 3
        %985 = vperm.xlu0 %984, %v841
        %v986 = vpop.permute.xlu0 %985
        %v988 = vperm.slane %v822, 3
        %v989 = vmul.f32 %v982, %v988
        %v990 = vmul.f32 %v986, %v988
        %991 = vset.pattern.permute.xlu0 4
        %992 = vperm.xlu0 %991, %v840
        %v993 = vpop.permute.xlu0 %992
        %995 = vset.pattern.permute.xlu0 4
        %996 = vperm.xlu0 %995, %v841
        %v997 = vpop.permute.xlu0 %996
        %v999 = vperm.slane %v822, 4
        %v1000 = vmul.f32 %v993, %v999
        %v1001 = vmul.f32 %v997, %v999
        %1002 = vset.pattern.permute.xlu0 5
        %1003 = vperm.xlu0 %1002, %v840
        %v1004 = vpop.permute.xlu0 %1003
        %1006 = vset.pattern.permute.xlu0 5
        %1007 = vperm.xlu0 %1006, %v841
        %v1008 = vpop.permute.xlu0 %1007
        %v1010 = vperm.slane %v822, 5
        %v1011 = vmul.f32 %v1004, %v1010
        %v1012 = vmul.f32 %v1008, %v1010
        %1013 = vset.pattern.permute.xlu0 6
        %1014 = vperm.xlu0 %1013, %v840
        %v1015 = vpop.permute.xlu0 %1014
        %1017 = vset.pattern.permute.xlu0 6
        %1018 = vperm.xlu0 %1017, %v841
        %v1019 = vpop.permute.xlu0 %1018
        %v1021 = vperm.slane %v822, 6
        %v1022 = vmul.f32 %v1015, %v1021
        %v1023 = vmul.f32 %v1019, %v1021
        %1024 = vset.pattern.permute.xlu0 7
        %1025 = vperm.xlu0 %1024, %v840
        %v1026 = vpop.permute.xlu0 %1025
        %1028 = vset.pattern.permute.xlu0 7
        %1029 = vperm.xlu0 %1028, %v841
        %v1030 = vpop.permute.xlu0 %1029
        %v1032 = vperm.slane %v822, 7
        %v1033 = vmul.f32 %v1026, %v1032
        %v1034 = vmul.f32 %v1030, %v1032
        %v1035 = vmul.f32 %v893, %v819
        %v1036 = vmul.f32 %v895, %v820
        %v1037 = vadd.f32 %v1035, %v956
        %v1038 = vadd.f32 %v1036, %v957
        %1040 = vset.pattern.permute.xlu0 0
        %1041 = vperm.xlu0 %1040, %v873
        %v1042 = vpop.permute.xlu0 %1041
        %1045 = vset.pattern.permute.xlu0 0
        %1046 = vperm.xlu0 %1045, %v874
        %v1047 = vpop.permute.xlu0 %1046
        %v1049 = vmul.f32 %v1042, %v1037
        %v1050 = vmul.f32 %v1047, %v1038
        %v1051 = vsel %vm616, %v1049, 0.0
        %v1052 = vsel %vm616, %v1050, 0.0
        %v1053 = vadd.f32 %v1051, %v1052
        %v1054 = vrot.slane %v1053, 4
        %v1055 = vadd.f32 %v1053, %v1054
        %v1056 = vrot.slane %v1055, 2
        %v1057 = vadd.f32 %v1055, %v1056
        %v1058 = vrot.slane %v1057, 1
        %v1059 = vadd.f32 %v1057, %v1058
        %v1060 = vmul.f32 %v900, %v1037
        %v1061 = vmul.f32 %v902, %v1038
        %v1062 = vadd.f32 %v1060, %v967
        %v1063 = vadd.f32 %v1061, %v968
        %1064 = vset.pattern.permute.xlu0 1
        %1065 = vperm.xlu0 %1064, %v873
        %v1066 = vpop.permute.xlu0 %1065
        %1068 = vset.pattern.permute.xlu0 1
        %1069 = vperm.xlu0 %1068, %v874
        %v1070 = vpop.permute.xlu0 %1069
        %v1072 = vmul.f32 %v1066, %v1062
        %v1073 = vmul.f32 %v1070, %v1063
        %v1074 = vsel %vm616, %v1072, 0.0
        %v1075 = vsel %vm616, %v1073, 0.0
        %v1076 = vadd.f32 %v1074, %v1075
        %v1077 = vrot.slane %v1076, 4
        %v1078 = vadd.f32 %v1076, %v1077
        %v1079 = vrot.slane %v1078, 2
        %v1080 = vadd.f32 %v1078, %v1079
        %v1081 = vrot.slane %v1080, 1
        %v1082 = vadd.f32 %v1080, %v1081
        %v1083 = vmul.f32 %v907, %v1062
        %v1084 = vmul.f32 %v909, %v1063
        %v1085 = vadd.f32 %v1083, %v978
        %v1086 = vadd.f32 %v1084, %v979
        %1087 = vset.pattern.permute.xlu0 2
        %1088 = vperm.xlu0 %1087, %v873
        %v1089 = vpop.permute.xlu0 %1088
        %1091 = vset.pattern.permute.xlu0 2
        %1092 = vperm.xlu0 %1091, %v874
        %v1093 = vpop.permute.xlu0 %1092
        %v1095 = vmul.f32 %v1089, %v1085
        %v1096 = vmul.f32 %v1093, %v1086
        %v1097 = vsel %vm616, %v1095, 0.0
        %v1098 = vsel %vm616, %v1096, 0.0
        %v1099 = vadd.f32 %v1097, %v1098
        %v1100 = vrot.slane %v1099, 4
        %v1101 = vadd.f32 %v1099, %v1100
        %v1102 = vrot.slane %v1101, 2
        %v1103 = vadd.f32 %v1101, %v1102
        %v1104 = vrot.slane %v1103, 1
        %v1105 = vadd.f32 %v1103, %v1104
        %v1106 = vmul.f32 %v914, %v1085
        %v1107 = vmul.f32 %v916, %v1086
        %v1108 = vadd.f32 %v1106, %v989
        %v1109 = vadd.f32 %v1107, %v990
        %1110 = vset.pattern.permute.xlu0 3
        %1111 = vperm.xlu0 %1110, %v873
        %v1112 = vpop.permute.xlu0 %1111
        %1114 = vset.pattern.permute.xlu0 3
        %1115 = vperm.xlu0 %1114, %v874
        %v1116 = vpop.permute.xlu0 %1115
        %v1118 = vmul.f32 %v1112, %v1108
        %v1119 = vmul.f32 %v1116, %v1109
        %v1120 = vsel %vm616, %v1118, 0.0
        %v1121 = vsel %vm616, %v1119, 0.0
        %v1122 = vadd.f32 %v1120, %v1121
        %v1123 = vrot.slane %v1122, 4
        %v1124 = vadd.f32 %v1122, %v1123
        %v1125 = vrot.slane %v1124, 2
        %v1126 = vadd.f32 %v1124, %v1125
        %v1127 = vrot.slane %v1126, 1
        %v1128 = vadd.f32 %v1126, %v1127
        %v1129 = vmul.f32 %v921, %v1108
        %v1130 = vmul.f32 %v923, %v1109
        %v1131 = vadd.f32 %v1129, %v1000
        %v1132 = vadd.f32 %v1130, %v1001
        %1133 = vset.pattern.permute.xlu0 4
        %1134 = vperm.xlu0 %1133, %v873
        %v1135 = vpop.permute.xlu0 %1134
        %1137 = vset.pattern.permute.xlu0 4
        %1138 = vperm.xlu0 %1137, %v874
        %v1139 = vpop.permute.xlu0 %1138
        %v1141 = vmul.f32 %v1135, %v1131
        %v1142 = vmul.f32 %v1139, %v1132
        %v1143 = vsel %vm616, %v1141, 0.0
        %v1144 = vsel %vm616, %v1142, 0.0
        %v1145 = vadd.f32 %v1143, %v1144
        %v1146 = vrot.slane %v1145, 4
        %v1147 = vadd.f32 %v1145, %v1146
        %v1148 = vrot.slane %v1147, 2
        %v1149 = vadd.f32 %v1147, %v1148
        %v1150 = vrot.slane %v1149, 1
        %v1151 = vadd.f32 %v1149, %v1150
        %v1152 = vmul.f32 %v928, %v1131
        %v1153 = vmul.f32 %v930, %v1132
        %v1154 = vadd.f32 %v1152, %v1011
        %v1155 = vadd.f32 %v1153, %v1012
        %1156 = vset.pattern.permute.xlu0 5
        %1157 = vperm.xlu0 %1156, %v873
        %v1158 = vpop.permute.xlu0 %1157
        %1160 = vset.pattern.permute.xlu0 5
        %1161 = vperm.xlu0 %1160, %v874
        %v1162 = vpop.permute.xlu0 %1161
        %v1164 = vmul.f32 %v1158, %v1154
        %v1165 = vmul.f32 %v1162, %v1155
        %v1166 = vsel %vm616, %v1164, 0.0
        %v1167 = vsel %vm616, %v1165, 0.0
        %v1168 = vadd.f32 %v1166, %v1167
        %v1169 = vrot.slane %v1168, 4
        %v1170 = vadd.f32 %v1168, %v1169
        %v1171 = vrot.slane %v1170, 2
        %v1172 = vadd.f32 %v1170, %v1171
        %v1173 = vrot.slane %v1172, 1
        %v1174 = vadd.f32 %v1172, %v1173
        %v1175 = vmul.f32 %v935, %v1154
        %v1176 = vmul.f32 %v937, %v1155
        %v1177 = vadd.f32 %v1175, %v1022
        %v1178 = vadd.f32 %v1176, %v1023
        %1179 = vset.pattern.permute.xlu0 6
        %1180 = vperm.xlu0 %1179, %v873
        %v1181 = vpop.permute.xlu0 %1180
        %1183 = vset.pattern.permute.xlu0 6
        %1184 = vperm.xlu0 %1183, %v874
        %v1185 = vpop.permute.xlu0 %1184
        %v1187 = vmul.f32 %v1181, %v1177
        %v1188 = vmul.f32 %v1185, %v1178
        %v1189 = vsel %vm616, %v1187, 0.0
        %v1190 = vsel %vm616, %v1188, 0.0
        %v1191 = vadd.f32 %v1189, %v1190
        %v1192 = vrot.slane %v1191, 4
        %v1193 = vadd.f32 %v1191, %v1192
        %v1194 = vrot.slane %v1193, 2
        %v1195 = vadd.f32 %v1193, %v1194
        %v1196 = vrot.slane %v1195, 1
        %v1197 = vadd.f32 %v1195, %v1196
        %v1198 = vmul.f32 %v942, %v1177
        %v1199 = vmul.f32 %v944, %v1178
        %v1200 = vadd.f32 %v1198, %v1033
        %v1201 = vadd.f32 %v1199, %v1034
        %1202 = vset.pattern.permute.xlu0 7
        %1203 = vperm.xlu0 %1202, %v873
        %v1204 = vpop.permute.xlu0 %1203
        %1206 = vset.pattern.permute.xlu0 7
        %1207 = vperm.xlu0 %1206, %v874
        %v1208 = vpop.permute.xlu0 %1207
        %v1210 = vmul.f32 %v1204, %v1200
        %v1211 = vmul.f32 %v1208, %v1201
        %v1212 = vsel %vm616, %v1210, 0.0
        %v1213 = vsel %vm616, %v1211, 0.0
        %v1214 = vadd.f32 %v1212, %v1213
        %v1215 = vrot.slane %v1214, 4
        %v1216 = vadd.f32 %v1214, %v1215
        %v1217 = vrot.slane %v1216, 2
        %v1218 = vadd.f32 %v1216, %v1217
        %v1219 = vrot.slane %v1218, 1
        %v1220 = vadd.f32 %v1218, %v1219
        %v1221 = vsel %vm758, %v1059, %v1082
        %vm1222 = vcmask 1041408
        %v1223 = vsel %vm1222, %v1221, %v1105
        %vm1224 = vcmask 1042432
        %v1225 = vsel %vm1224, %v1223, %v1128
        %vm1226 = vcmask 1043456
        %v1227 = vsel %vm1226, %v1225, %v1151
        %vm1228 = vcmask 1044480
        %v1229 = vsel %vm1228, %v1227, %v1174
        %vm1230 = vcmask 1045504
        %v1231 = vsel %vm1230, %v1229, %v1197
        %vm1232 = vcmask 1046528
        %v1233 = vsel %vm1232, %v1231, %v1220
        %1234 = vst.msk [vmem:[#allocation4] sm:$0xff] %vm616, %v1233
        %s1235 = scalar_lea.vmem [#allocation5], 8
        %v1236 = vld [vmem:[%s1235] sm:$0xff]
        %s1237 = scalar_lea.vmem [#allocation6], 8
        %v1238 = vld [vmem:[%s1237] sm:$0xff]
        %s1239 = scalar_lea.vmem [#allocation7], 8
        %v1240 = vld [vmem:[%s1239] sm:$0xff]
        %1241 = vxpose.xlu0.b32.start [1/16] %v1240, 128
        %1242 = vxpose.xlu0.b32.cont [2/16] 0.0, 128
        %1243 = vxpose.xlu0.b32.cont [3/16] 0.0, 128
        %1244 = vxpose.xlu0.b32.cont [4/16] 0.0, 128
        %1245 = vxpose.xlu0.b32.cont [5/16] 0.0, 128
        %1246 = vxpose.xlu0.b32.cont [6/16] 0.0, 128
        %1247 = vxpose.xlu0.b32.cont [7/16] 0.0, 128
        %1248 = vxpose.xlu0.b32.cont [8/16] 0.0, 128
        %1249 = vxpose.xlu0.b32.cont [9/16] 0.0, 128
        %1250 = vxpose.xlu0.b32.cont [10/16] 0.0, 128
        %1251 = vxpose.xlu0.b32.cont [11/16] 0.0, 128
        %1252 = vxpose.xlu0.b32.cont [12/16] 0.0, 128
        %1253 = vxpose.xlu0.b32.cont [13/16] 0.0, 128
        %1254 = vxpose.xlu0.b32.cont [14/16] 0.0, 128
        %1255 = vxpose.xlu0.b32.cont [15/16] 0.0, 128
        %1256 = vxpose.xlu0.b32.end [16/16] 0.0, 128
        %v1257 = vpop.trf.xlu0
        %v1258 = vpop.trf.xlu0
        %v1259 = vpop.trf.xlu0
        %v1260 = vpop.trf.xlu0
        %v1261 = vpop.trf.xlu0
        %v1262 = vpop.trf.xlu0
        %v1263 = vpop.trf.xlu0
        %v1264 = vpop.trf.xlu0
        %v1265 = vpop.trf.xlu0
        %v1266 = vpop.trf.xlu0
        %v1267 = vpop.trf.xlu0
        %v1268 = vpop.trf.xlu0
        %v1269 = vpop.trf.xlu0
        %v1270 = vpop.trf.xlu0
        %v1271 = vpop.trf.xlu0
        %v1272 = vpop.trf.xlu0
        %s1273 = scalar_lea.vmem [#allocation8], 8
        %v1274 = vld [vmem:[%s1273] sm:$0xff]
        %1275 = vxpose.xlu0.b32.start [1/16] %v1274, 128
        %1276 = vxpose.xlu0.b32.cont [2/16] 0.0, 128
        %1277 = vxpose.xlu0.b32.cont [3/16] 0.0, 128
        %1278 = vxpose.xlu0.b32.cont [4/16] 0.0, 128
        %1279 = vxpose.xlu0.b32.cont [5/16] 0.0, 128
        %1280 = vxpose.xlu0.b32.cont [6/16] 0.0, 128
        %1281 = vxpose.xlu0.b32.cont [7/16] 0.0, 128
        %1282 = vxpose.xlu0.b32.cont [8/16] 0.0, 128
        %1283 = vxpose.xlu0.b32.cont [9/16] 0.0, 128
        %1284 = vxpose.xlu0.b32.cont [10/16] 0.0, 128
        %1285 = vxpose.xlu0.b32.cont [11/16] 0.0, 128
        %1286 = vxpose.xlu0.b32.cont [12/16] 0.0, 128
        %1287 = vxpose.xlu0.b32.cont [13/16] 0.0, 128
        %1288 = vxpose.xlu0.b32.cont [14/16] 0.0, 128
        %1289 = vxpose.xlu0.b32.cont [15/16] 0.0, 128
        %1290 = vxpose.xlu0.b32.end [16/16] 0.0, 128
        %v1291 = vpop.trf.xlu0
        %v1292 = vpop.trf.xlu0
        %v1293 = vpop.trf.xlu0
        %v1294 = vpop.trf.xlu0
        %v1295 = vpop.trf.xlu0
        %v1296 = vpop.trf.xlu0
        %v1297 = vpop.trf.xlu0
        %v1298 = vpop.trf.xlu0
        %v1299 = vpop.trf.xlu0
        %v1300 = vpop.trf.xlu0
        %v1301 = vpop.trf.xlu0
        %v1302 = vpop.trf.xlu0
        %v1303 = vpop.trf.xlu0
        %v1304 = vpop.trf.xlu0
        %v1305 = vpop.trf.xlu0
        %v1306 = vpop.trf.xlu0
        %v1307 = vperm.slane %v1236, 0
        %v1308 = vmul.f32 %v817, %v1307
        %v1309 = vmul.f32 %v818, %v1307
        %v1310 = vmul.f32 %v1308, 1.442695
        %v1311 = vpow.pop %v1310
        %v1312 = vmul.f32 %v1309, 1.442695
        %v1313 = vpow.pop %v1312
        %v1314 = vperm.slane %v1236, 1
        %v1315 = vmul.f32 %v817, %v1314
        %v1316 = vmul.f32 %v818, %v1314
        %v1317 = vmul.f32 %v1315, 1.442695
        %v1318 = vpow.pop %v1317
        %v1319 = vmul.f32 %v1316, 1.442695
        %v1320 = vpow.pop %v1319
        %v1321 = vperm.slane %v1236, 2
        %v1322 = vmul.f32 %v817, %v1321
        %v1323 = vmul.f32 %v818, %v1321
        %v1324 = vmul.f32 %v1322, 1.442695
        %v1325 = vpow.pop %v1324
        %v1326 = vmul.f32 %v1323, 1.442695
        %v1327 = vpow.pop %v1326
        %v1328 = vperm.slane %v1236, 3
        %v1329 = vmul.f32 %v817, %v1328
        %v1330 = vmul.f32 %v818, %v1328
        %v1331 = vmul.f32 %v1329, 1.442695
        %v1332 = vpow.pop %v1331
        %v1333 = vmul.f32 %v1330, 1.442695
        %v1334 = vpow.pop %v1333
        %v1335 = vperm.slane %v1236, 4
        %v1336 = vmul.f32 %v817, %v1335
        %v1337 = vmul.f32 %v818, %v1335
        %v1338 = vmul.f32 %v1336, 1.442695
        %v1339 = vpow.pop %v1338
        %v1340 = vmul.f32 %v1337, 1.442695
        %v1341 = vpow.pop %v1340
        %v1342 = vperm.slane %v1236, 5
        %v1343 = vmul.f32 %v817, %v1342
        %v1344 = vmul.f32 %v818, %v1342
        %v1345 = vmul.f32 %v1343, 1.442695
        %v1346 = vpow.pop %v1345
        %v1347 = vmul.f32 %v1344, 1.442695
        %v1348 = vpow.pop %v1347
        %v1349 = vperm.slane %v1236, 6
        %v1350 = vmul.f32 %v817, %v1349
        %v1351 = vmul.f32 %v818, %v1349
        %v1352 = vmul.f32 %v1350, 1.442695
        %v1353 = vpow.pop %v1352
        %v1354 = vmul.f32 %v1351, 1.442695
        %v1355 = vpow.pop %v1354
        %v1356 = vperm.slane %v1236, 7
        %v1357 = vmul.f32 %v817, %v1356
        %v1358 = vmul.f32 %v818, %v1356
        %v1359 = vmul.f32 %v1357, 1.442695
        %v1360 = vpow.pop %v1359
        %v1361 = vmul.f32 %v1358, 1.442695
        %v1362 = vpow.pop %v1361
        %1364 = vset.pattern.permute.xlu0 0
        %1365 = vperm.xlu0 %1364, %v1257
        %v1366 = vpop.permute.xlu0 %1365
        %1369 = vset.pattern.permute.xlu0 0
        %1370 = vperm.xlu0 %1369, %v1258
        %v1371 = vpop.permute.xlu0 %1370
        %v1373 = vperm.slane %v1238, 0
        %v1374 = vmul.f32 %v1366, %v1373
        %v1375 = vmul.f32 %v1371, %v1373
        %1376 = vset.pattern.permute.xlu0 1
        %1377 = vperm.xlu0 %1376, %v1257
        %v1378 = vpop.permute.xlu0 %1377
        %1380 = vset.pattern.permute.xlu0 1
        %1381 = vperm.xlu0 %1380, %v1258
        %v1382 = vpop.permute.xlu0 %1381
        %v1384 = vperm.slane %v1238, 1
        %v1385 = vmul.f32 %v1378, %v1384
        %v1386 = vmul.f32 %v1382, %v1384
        %1387 = vset.pattern.permute.xlu0 2
        %1388 = vperm.xlu0 %1387, %v1257
        %v1389 = vpop.permute.xlu0 %1388
        %1391 = vset.pattern.permute.xlu0 2
        %1392 = vperm.xlu0 %1391, %v1258
        %v1393 = vpop.permute.xlu0 %1392
        %v1395 = vperm.slane %v1238, 2
        %v1396 = vmul.f32 %v1389, %v1395
        %v1397 = vmul.f32 %v1393, %v1395
        %1398 = vset.pattern.permute.xlu0 3
        %1399 = vperm.xlu0 %1398, %v1257
        %v1400 = vpop.permute.xlu0 %1399
        %1402 = vset.pattern.permute.xlu0 3
        %1403 = vperm.xlu0 %1402, %v1258
        %v1404 = vpop.permute.xlu0 %1403
        %v1406 = vperm.slane %v1238, 3
        %v1407 = vmul.f32 %v1400, %v1406
        %v1408 = vmul.f32 %v1404, %v1406
        %1409 = vset.pattern.permute.xlu0 4
        %1410 = vperm.xlu0 %1409, %v1257
        %v1411 = vpop.permute.xlu0 %1410
        %1413 = vset.pattern.permute.xlu0 4
        %1414 = vperm.xlu0 %1413, %v1258
        %v1415 = vpop.permute.xlu0 %1414
        %v1417 = vperm.slane %v1238, 4
        %v1418 = vmul.f32 %v1411, %v1417
        %v1419 = vmul.f32 %v1415, %v1417
        %1420 = vset.pattern.permute.xlu0 5
        %1421 = vperm.xlu0 %1420, %v1257
        %v1422 = vpop.permute.xlu0 %1421
        %1424 = vset.pattern.permute.xlu0 5
        %1425 = vperm.xlu0 %1424, %v1258
        %v1426 = vpop.permute.xlu0 %1425
        %v1428 = vperm.slane %v1238, 5
        %v1429 = vmul.f32 %v1422, %v1428
        %v1430 = vmul.f32 %v1426, %v1428
        %1431 = vset.pattern.permute.xlu0 6
        %1432 = vperm.xlu0 %1431, %v1257
        %v1433 = vpop.permute.xlu0 %1432
        %1435 = vset.pattern.permute.xlu0 6
        %1436 = vperm.xlu0 %1435, %v1258
        %v1437 = vpop.permute.xlu0 %1436
        %v1439 = vperm.slane %v1238, 6
        %v1440 = vmul.f32 %v1433, %v1439
        %v1441 = vmul.f32 %v1437, %v1439
        %1442 = vset.pattern.permute.xlu0 7
        %1443 = vperm.xlu0 %1442, %v1257
        %v1444 = vpop.permute.xlu0 %1443
        %1446 = vset.pattern.permute.xlu0 7
        %1447 = vperm.xlu0 %1446, %v1258
        %v1448 = vpop.permute.xlu0 %1447
        %v1450 = vperm.slane %v1238, 7
        %v1451 = vmul.f32 %v1444, %v1450
        %v1452 = vmul.f32 %v1448, %v1450
        %v1453 = vmul.f32 %v1311, %v1200
        %v1454 = vmul.f32 %v1313, %v1201
        %v1455 = vadd.f32 %v1453, %v1374
        %v1456 = vadd.f32 %v1454, %v1375
        %1458 = vset.pattern.permute.xlu0 0
        %1459 = vperm.xlu0 %1458, %v1291
        %v1460 = vpop.permute.xlu0 %1459
        %1463 = vset.pattern.permute.xlu0 0
        %1464 = vperm.xlu0 %1463, %v1292
        %v1465 = vpop.permute.xlu0 %1464
        %v1467 = vmul.f32 %v1460, %v1455
        %v1468 = vmul.f32 %v1465, %v1456
        %v1469 = vsel %vm616, %v1467, 0.0
        %v1470 = vsel %vm616, %v1468, 0.0
        %v1471 = vadd.f32 %v1469, %v1470
        %v1472 = vrot.slane %v1471, 4
        %v1473 = vadd.f32 %v1471, %v1472
        %v1474 = vrot.slane %v1473, 2
        %v1475 = vadd.f32 %v1473, %v1474
        %v1476 = vrot.slane %v1475, 1
        %v1477 = vadd.f32 %v1475, %v1476
        %v1478 = vmul.f32 %v1318, %v1455
        %v1479 = vmul.f32 %v1320, %v1456
        %v1480 = vadd.f32 %v1478, %v1385
        %v1481 = vadd.f32 %v1479, %v1386
        %1482 = vset.pattern.permute.xlu0 1
        %1483 = vperm.xlu0 %1482, %v1291
        %v1484 = vpop.permute.xlu0 %1483
        %1486 = vset.pattern.permute.xlu0 1
        %1487 = vperm.xlu0 %1486, %v1292
        %v1488 = vpop.permute.xlu0 %1487
        %v1490 = vmul.f32 %v1484, %v1480
        %v1491 = vmul.f32 %v1488, %v1481
        %v1492 = vsel %vm616, %v1490, 0.0
        %v1493 = vsel %vm616, %v1491, 0.0
        %v1494 = vadd.f32 %v1492, %v1493
        %v1495 = vrot.slane %v1494, 4
        %v1496 = vadd.f32 %v1494, %v1495
        %v1497 = vrot.slane %v1496, 2
        %v1498 = vadd.f32 %v1496, %v1497
        %v1499 = vrot.slane %v1498, 1
        %v1500 = vadd.f32 %v1498, %v1499
        %v1501 = vmul.f32 %v1325, %v1480
        %v1502 = vmul.f32 %v1327, %v1481
        %v1503 = vadd.f32 %v1501, %v1396
        %v1504 = vadd.f32 %v1502, %v1397
        %1505 = vset.pattern.permute.xlu0 2
        %1506 = vperm.xlu0 %1505, %v1291
        %v1507 = vpop.permute.xlu0 %1506
        %1509 = vset.pattern.permute.xlu0 2
        %1510 = vperm.xlu0 %1509, %v1292
        %v1511 = vpop.permute.xlu0 %1510
        %v1513 = vmul.f32 %v1507, %v1503
        %v1514 = vmul.f32 %v1511, %v1504
        %v1515 = vsel %vm616, %v1513, 0.0
        %v1516 = vsel %vm616, %v1514, 0.0
        %v1517 = vadd.f32 %v1515, %v1516
        %v1518 = vrot.slane %v1517, 4
        %v1519 = vadd.f32 %v1517, %v1518
        %v1520 = vrot.slane %v1519, 2
        %v1521 = vadd.f32 %v1519, %v1520
        %v1522 = vrot.slane %v1521, 1
        %v1523 = vadd.f32 %v1521, %v1522
        %v1524 = vmul.f32 %v1332, %v1503
        %v1525 = vmul.f32 %v1334, %v1504
        %v1526 = vadd.f32 %v1524, %v1407
        %v1527 = vadd.f32 %v1525, %v1408
        %1528 = vset.pattern.permute.xlu0 3
        %1529 = vperm.xlu0 %1528, %v1291
        %v1530 = vpop.permute.xlu0 %1529
        %1532 = vset.pattern.permute.xlu0 3
        %1533 = vperm.xlu0 %1532, %v1292
        %v1534 = vpop.permute.xlu0 %1533
        %v1536 = vmul.f32 %v1530, %v1526
        %v1537 = vmul.f32 %v1534, %v1527
        %v1538 = vsel %vm616, %v1536, 0.0
        %v1539 = vsel %vm616, %v1537, 0.0
        %v1540 = vadd.f32 %v1538, %v1539
        %v1541 = vrot.slane %v1540, 4
        %v1542 = vadd.f32 %v1540, %v1541
        %v1543 = vrot.slane %v1542, 2
        %v1544 = vadd.f32 %v1542, %v1543
        %v1545 = vrot.slane %v1544, 1
        %v1546 = vadd.f32 %v1544, %v1545
        %v1547 = vmul.f32 %v1339, %v1526
        %v1548 = vmul.f32 %v1341, %v1527
        %v1549 = vadd.f32 %v1547, %v1418
        %v1550 = vadd.f32 %v1548, %v1419
        %1551 = vset.pattern.permute.xlu0 4
        %1552 = vperm.xlu0 %1551, %v1291
        %v1553 = vpop.permute.xlu0 %1552
        %1555 = vset.pattern.permute.xlu0 4
        %1556 = vperm.xlu0 %1555, %v1292
        %v1557 = vpop.permute.xlu0 %1556
        %v1559 = vmul.f32 %v1553, %v1549
        %v1560 = vmul.f32 %v1557, %v1550
        %v1561 = vsel %vm616, %v1559, 0.0
        %v1562 = vsel %vm616, %v1560, 0.0
        %v1563 = vadd.f32 %v1561, %v1562
        %v1564 = vrot.slane %v1563, 4
        %v1565 = vadd.f32 %v1563, %v1564
        %v1566 = vrot.slane %v1565, 2
        %v1567 = vadd.f32 %v1565, %v1566
        %v1568 = vrot.slane %v1567, 1
        %v1569 = vadd.f32 %v1567, %v1568
        %v1570 = vmul.f32 %v1346, %v1549
        %v1571 = vmul.f32 %v1348, %v1550
        %v1572 = vadd.f32 %v1570, %v1429
        %v1573 = vadd.f32 %v1571, %v1430
        %1574 = vset.pattern.permute.xlu0 5
        %1575 = vperm.xlu0 %1574, %v1291
        %v1576 = vpop.permute.xlu0 %1575
        %1578 = vset.pattern.permute.xlu0 5
        %1579 = vperm.xlu0 %1578, %v1292
        %v1580 = vpop.permute.xlu0 %1579
        %v1582 = vmul.f32 %v1576, %v1572
        %v1583 = vmul.f32 %v1580, %v1573
        %v1584 = vsel %vm616, %v1582, 0.0
        %v1585 = vsel %vm616, %v1583, 0.0
        %v1586 = vadd.f32 %v1584, %v1585
        %v1587 = vrot.slane %v1586, 4
        %v1588 = vadd.f32 %v1586, %v1587
        %v1589 = vrot.slane %v1588, 2
        %v1590 = vadd.f32 %v1588, %v1589
        %v1591 = vrot.slane %v1590, 1
        %v1592 = vadd.f32 %v1590, %v1591
        %v1593 = vmul.f32 %v1353, %v1572
        %v1594 = vmul.f32 %v1355, %v1573
        %v1595 = vadd.f32 %v1593, %v1440
        %v1596 = vadd.f32 %v1594, %v1441
        %1597 = vset.pattern.permute.xlu0 6
        %1598 = vperm.xlu0 %1597, %v1291
        %v1599 = vpop.permute.xlu0 %1598
        %1601 = vset.pattern.permute.xlu0 6
        %1602 = vperm.xlu0 %1601, %v1292
        %v1603 = vpop.permute.xlu0 %1602
        %v1605 = vmul.f32 %v1599, %v1595
        %v1606 = vmul.f32 %v1603, %v1596
        %v1607 = vsel %vm616, %v1605, 0.0
        %v1608 = vsel %vm616, %v1606, 0.0
        %v1609 = vadd.f32 %v1607, %v1608
        %v1610 = vrot.slane %v1609, 4
        %v1611 = vadd.f32 %v1609, %v1610
        %v1612 = vrot.slane %v1611, 2
        %v1613 = vadd.f32 %v1611, %v1612
        %v1614 = vrot.slane %v1613, 1
        %v1615 = vadd.f32 %v1613, %v1614
        %v1616 = vmul.f32 %v1360, %v1595
        %v1617 = vmul.f32 %v1362, %v1596
        %v1618 = vadd.f32 %v1616, %v1451
        %v1619 = vadd.f32 %v1617, %v1452
        %1620 = vset.pattern.permute.xlu0 7
        %1621 = vperm.xlu0 %1620, %v1291
        %v1622 = vpop.permute.xlu0 %1621
        %1624 = vset.pattern.permute.xlu0 7
        %1625 = vperm.xlu0 %1624, %v1292
        %v1626 = vpop.permute.xlu0 %1625
        %v1628 = vmul.f32 %v1622, %v1618
        %v1629 = vmul.f32 %v1626, %v1619
        %v1630 = vsel %vm616, %v1628, 0.0
        %v1631 = vsel %vm616, %v1629, 0.0
        %v1632 = vadd.f32 %v1630, %v1631
        %v1633 = vrot.slane %v1632, 4
        %v1634 = vadd.f32 %v1632, %v1633
        %v1635 = vrot.slane %v1634, 2
        %v1636 = vadd.f32 %v1634, %v1635
        %v1637 = vrot.slane %v1636, 1
        %v1638 = vadd.f32 %v1636, %v1637
        %v1639 = vsel %vm758, %v1477, %v1500
        %v1640 = vsel %vm1222, %v1639, %v1523
        %v1641 = vsel %vm1224, %v1640, %v1546
        %v1642 = vsel %vm1226, %v1641, %v1569
        %v1643 = vsel %vm1228, %v1642, %v1592
        %v1644 = vsel %vm1230, %v1643, %v1615
        %v1645 = vsel %vm1232, %v1644, %v1638
        %s1646 = scalar_lea.vmem [#allocation4], 8
        %1647 = vst.msk [vmem:[%s1646] sm:$0xff] %vm616, %v1645
        %1648 = vst.msk [vmem:[#allocation2] sm:$0xff] %vm616, %v1618
        %1649 = vst.msk [vmem:[#allocation2 + $0x8] sm:$0xff] %vm616, %v1619
        %v1650 = vld [vmem:[#allocation4] sm:$0xff]
        %v1651 = vld [vmem:[#allocation4 + $0x8] sm:$0xff]
        %v1652 = vld [vmem:[%s10] sm:$0x1]
        %v1654 = vperm.slane %v1652, 0
        %v1656 = vmul.f32 %v696, %v1654
        %v1657 = vmul.f32 %v697, %v1654
        %v1658 = vadd.f32 %v1650, %v1656
        %v1659 = vadd.f32 %v1651, %v1657
        %v1660 = vsub.f32 0.0, %v612
        %v1661 = vsub.f32 0.0, %v614
        %v1662 = vmul.f32 %v1660, 1.442695
        %v1663 = vpow.pop %v1662
        %v1664 = vmul.f32 %v1661, 1.442695
        %v1665 = vpow.pop %v1664
        %v1666 = vadd.f32 %v1663, 1.0
        %v1667 = vadd.f32 %v1665, 1.0
        %v1668 = vrcp.pop %v1666
        %v1669 = vmul.f32 %v1666, %v1668
        %v1670 = vsub.f32 1.0, %v1669
        %v1671 = vmul.f32 %v1668, %v1670
        %v1672 = vadd.f32 %v1668, %v1671
        %vm1673 = vweird.f32 %v1666
        %vm1674 = vweird.f32 %v1668
        %vm1675 = vmor %vm1673, %vm1674
        %v1676 = vsel %vm1675, %v1668, %v1672
        %v1677 = vand.u32 2147483647, %v1666
        %vm1678 = vcmp.eq.f32.partialorder %v1677, 8.507059e+37
        %v1679 = vand.u32 %v1666, 2147483648
        %v1680 = vor.u32 1.1754944e-38, %v1679
        %v1681 = vsel %vm1678, %v1680, %v1676
        %v1682 = vmul.f32 1.0, %v1681
        %v1683 = vrcp.pop %v1667
        %v1684 = vmul.f32 %v1667, %v1683
        %v1685 = vsub.f32 1.0, %v1684
        %v1686 = vmul.f32 %v1683, %v1685
        %v1687 = vadd.f32 %v1683, %v1686
        %vm1688 = vweird.f32 %v1667
        %vm1689 = vweird.f32 %v1683
        %vm1690 = vmor %vm1688, %vm1689
        %v1691 = vsel %vm1690, %v1683, %v1687
        %v1692 = vand.u32 2147483647, %v1667
        %vm1693 = vcmp.eq.f32.partialorder %v1692, 8.507059e+37
        %v1694 = vand.u32 %v1667, 2147483648
        %v1695 = vor.u32 1.1754944e-38, %v1694
        %v1696 = vsel %vm1693, %v1695, %v1691
        %v1697 = vmul.f32 1.0, %v1696
        %v1698 = vmul.f32 %v612, %v1682
        %v1699 = vmul.f32 %v614, %v1697
        %v1700 = vmul.f32 %v1658, %v1698
        %v1701 = vmul.f32 %v1659, %v1699
        %v1702 = vpack.c.bf16 %v1701, %v1700
        %v1703 = vld [vmem:[%s11] sm:$0xf]
        %v1704 = vld [vmem:[%s11 + $0x4] sm:$0xf]
        %v1705 = vld [vmem:[%s11 + $0x8] sm:$0xf]
        %v1706 = vld [vmem:[%s11 + $0xc] sm:$0xf]
        %v1707 = vld [vmem:[%s11 + $0x10] sm:$0xf]
        %v1708 = vld [vmem:[%s11 + $0x14] sm:$0xf]
        %v1709 = vld [vmem:[%s11 + $0x18] sm:$0xf]
        %v1710 = vld [vmem:[%s11 + $0x1c] sm:$0xf]
        %v1719 = vunpack.c.l.b16 %v1703
        %v1720 = vunpack.c.l.b16 %v1704
        %v1721 = vunpack.c.l.b16 %v1705
        %v1722 = vunpack.c.l.b16 %v1706
        %v1723 = vunpack.c.l.b16 %v1707
        %v1724 = vunpack.c.l.b16 %v1708
        %v1725 = vunpack.c.l.b16 %v1709
        %v1726 = vunpack.c.l.b16 %v1710
        %v1727 = vpack.c.b16 %v1720, %v1719
        %v1728 = vpack.c.b16 %v1722, %v1721
        %v1729 = vpack.c.b16 %v1724, %v1723
        %v1730 = vpack.c.b16 %v1726, %v1725
        %v1736 = vsel %vm616, %v1702, 0
        %1738 = vmatpush.bf16.msra.mxu0 0
        %1739 = vmatpush.bf16.msra.mxu0 0
        %1740 = vmatpush.bf16.msra.mxu0 0
        %1741 = vmatpush.bf16.msra.mxu0 0
        %1742 = vmatpush.bf16.msra.mxu0 %v1730
        %1743 = vmatpush.bf16.msra.mxu0 %v1729
        %1744 = vmatpush.bf16.msra.mxu0 %v1728
        %1745 = vmatpush.bf16.msra.mxu0 %v1727
        %1746 = vmatmul.bf16.gmra.mxu0 %v1736
        %v1747 = vpop.f32.mrf.mxu0
        %v1748 = vadd.f32 0.0, %v1747
        %v1749 = vpop.f32.mrf.mxu0
        %v1750 = vadd.f32 0.0, %v1749
        %1751 = vdwg.mxu0
        %v1752 = vld [vmem:[%s488] sm:$0xff]
        %v1753 = vld [vmem:[%s488 + $0x8] sm:$0xff]
        %v1754 = vadd.f32 %v1752, %v1748
        %v1755 = vadd.f32 %v1753, %v1750
        %1756 = vst.msk [vmem:[%s479] sm:$0xff] %vm506, %v1754
        %1757 = vst.msk [vmem:[%s479 + $0x8] sm:$0xff] %vm506, %v1755
        %s1758 = sand.u32 %s309, 1
        %s1759 = scalar_lea.sflag [#allocation11], %s1758
        %s1760 = sand.u32 %s309, 1
        %s1761 = smul.addr %s1760, 16
        %s1762 = scalar_lea.vmem [#allocation15], %s1761
        // Predicated region
        $region85: #{tpu_custom_call.1} parent=67 // pred_check
          %p1763 = pneg %p319
        $region86: #{tpu_custom_call.1} parent=67 // pred_check_branch
          %1765 = sbr.rel (%p1763) target = $region88
        $region87: #{tpu_custom_call.1} parent=67 // pred_region
          %s1766 = smul.u32 2, %s33
          %1768 = vsyncadd %s1759, 0
          %s1769 = smul.addr %s32, 4
          %s1770 = sadd.s32 %s1766, %s1769
          %s1771 = smul.addr %s1770, 8
          %s1772 = scalar_lea.hbm %s12, %s1771
          %s1773 = sshll.u32 %s1762, 4
          %s1774 = int_to_ptr.vmem [resolvable:$true] %s1773
          %s1775 = sshll.u32 %s1772, 4
          %s1776 = int_to_ptr.hbm [resolvable:$true] %s1775
          %1781 = dma.vmem_to_hbm [thread:$0]  %s1774, 256, %s1776, %s1759, 128, 128, 8
        $region88: #{tpu_custom_call.1} parent=67 // pred_fallthru
          _
      $region68: #{tpu_custom_call.1} parent=5 // pred_fallthru
        _
      %p1782 = scmp.le.s32.totalorder 2, %s23
      // Predicated region
      $region89: #{tpu_custom_call.1} parent=5 // pred_check
        %p1783 = pneg %p1782
      $region90: #{tpu_custom_call.1} parent=5 // pred_check_branch
        %1785 = sbr.rel (%p1783) target = $region92
      $region91: #{tpu_custom_call.1} parent=5 // pred_region
        %s1786 = ssub.s32 %s23, 2
        // Predicated region
        $region93: #{tpu_custom_call.1} parent=91 // pred_check
          %p1787 = pneg %p325
        $region94: #{tpu_custom_call.1} parent=91 // pred_check_branch
          %1789 = sbr.rel (%p1787) target = $region96
        $region95: #{tpu_custom_call.1} parent=91 // pred_region
          %s1790 = sand.u32 %s310, 1
          %s1791 = scalar_lea.sflag [#allocation11], %s1790
          %s1792 = sand.u32 %s310, 1
          %s1793 = smul.addr %s1792, 16
          %s1794 = scalar_lea.vmem [#allocation15], %s1793
          %1796 = dma.done %s1791, 256
        $region96: #{tpu_custom_call.1} parent=91 // pred_fallthru
          _
      $region92: #{tpu_custom_call.1} parent=5 // pred_fallthru
        _
    $region6: #{tpu_custom_call.1} parent=1 // loop_footer
      %s27 = sadd.s32 1, %s23
    $region7: #{tpu_custom_call.1} parent=1 // loop_footer_branch
      %22 = sbr.rel target = $region3
    $region8: #{tpu_custom_call.1} parent=1 // loop_exit
      _
    %1797 = vsyncpa [#allocation10], 1
    %s1798 = scalar_lea.sflag [#allocation10], 1
    %1799 = vsyncpa %s1798, 1
    %1800 = vsyncpa [#allocation13], 1
    %1801 = vsyncpa [#allocation11], 1
    %s1802 = scalar_lea.sflag [#allocation11], 1
    %1803 = vsyncpa %s1802, 1

</llo_original>
